<compile_context>
chip_gen: v6e
topology: v6e:2x2x1
jax: 0.10.0
libtpu: 0.0.40
codegen_flags: <defaults>
</compile_context>

<pallas_src>
import jax
import jax.numpy as jnp
from jax import lax
from jax.experimental import pallas as pl
from jax.experimental.pallas import tpu as pltpu


# ----------------------------------------------------------------------------
# Fused Pallas kernel: upsample + 1x1 conv + [concat] + (conv3x3+BN+ReLU) x 2
# ----------------------------------------------------------------------------

def decoding_block_kernel(
    skipped_ref,   # (1, H, W*Cs)     compute dtype  (NHWC rows, (w,c) flattened)
    upper_ref,     # (1, Hu, Wu*Cu)   compute dtype
    a_h_ref,       # (H, Hu)          compute dtype  bilinear H-interp matrix
    kw_ref,        # (Wu*Cu, W*Co)    compute dtype  kron(A_w^T, W_1x1): W-interp + 1x1 conv
    b_up_ref,      # (1, W*Co)        f32            1x1 conv bias tiled over w
    w1s_ref,       # (3, W*Cs, W*C1)  compute dtype  conv1 banded width matrices (skipped chans)
    w1u_ref,       # (3, W*Co, W*C1)  compute dtype  conv1 banded width matrices (upsample chans)
    s1_ref,        # (1, W*C1)        f32            folded BN scale, tiled over w
    b1_ref,        # (1, W*C1)        f32            folded BN bias (incl. conv bias)
    w2_ref,        # (3, W*C1, W*C2)  compute dtype  conv2 banded width matrices
    s2_ref,        # (1, W*C2)        f32
    b2_ref,        # (1, W*C2)        f32
    o_ref,         # (1, H, W*C2)     f32            flattened NHWC image
    pad_s,         # VMEM (H+2, W*Cs) row-haloed skipped branch
    pad_u,         # VMEM (H+2, W*Co) row-haloed upsample branch
    pad_h,         # VMEM (H+2, W*C1) row-haloed conv1 activation
):
    cdt = skipped_ref.dtype
    _, H, WCs = skipped_ref.shape
    WCo = kw_ref.shape[1]
    WC1 = s1_ref.shape[1]
    WC2 = s2_ref.shape[1]

    # --- 1. bilinear x2 upsample (separable) + fused 1x1 conv: two 2-D MXU dots
    u1 = jnp.dot(a_h_ref[...], upper_ref[0],
                 preferred_element_type=jnp.float32)             # (H, Wu*Cu)
    up = jnp.dot(u1.astype(cdt), kw_ref[...],
                 preferred_element_type=jnp.float32)             # (H, W*Co)
    up = up + b_up_ref[...]                                      # f32

    # --- 2. channel "concat" + 1-row zero halo live only in VMEM scratch
    pad_s[pl.ds(0, 1), :] = jnp.zeros((1, WCs), cdt)
    pad_s[pl.ds(H + 1, 1), :] = jnp.zeros((1, WCs), cdt)
    pad_u[pl.ds(0, 1), :] = jnp.zeros((1, WCo), cdt)
    pad_u[pl.ds(H + 1, 1), :] = jnp.zeros((1, WCo), cdt)
    pad_h[pl.ds(0, 1), :] = jnp.zeros((1, WC1), cdt)
    pad_h[pl.ds(H + 1, 1), :] = jnp.zeros((1, WC1), cdt)
    pad_s[pl.ds(1, H), :] = skipped_ref[0]
    pad_u[pl.ds(1, H), :] = up.astype(cdt)

    # --- 3. conv1 (3x3, SAME): 3 vertical taps x 2 channel groups = 6 banded dots
    acc1 = jnp.zeros((H, WC1), jnp.float32)
    for dy in range(3):
        acc1 = acc1 + jnp.dot(pad_s[pl.ds(dy, H), :], w1s_ref[dy],
                              preferred_element_type=jnp.float32)
        acc1 = acc1 + jnp.dot(pad_u[pl.ds(dy, H), :], w1u_ref[dy],
                              preferred_element_type=jnp.float32)
    h1 = jnp.maximum(acc1 * s1_ref[...] + b1_ref[...], 0.0)      # BN + ReLU, f32
    pad_h[pl.ds(1, H), :] = h1.astype(cdt)

    # --- 4. conv2 (3x3, SAME): 3 banded dots + BN + ReLU
    acc2 = jnp.zeros((H, WC2), jnp.float32)
    for dy in range(3):
        acc2 = acc2 + jnp.dot(pad_h[pl.ds(dy, H), :], w2_ref[dy],
                              preferred_element_type=jnp.float32)
    o_ref[0] = jnp.maximum(acc2 * s2_ref[...] + b2_ref[...], 0.0).astype(o_ref.dtype)


# ----------------------------------------------------------------------------
# Wrapper-side weight preprocessing
# ----------------------------------------------------------------------------

def _bilinear_matrix(in_size, scale):
    """Row-stochastic (out, in) matrix matching PyTorch bilinear, align_corners=False."""
    out_size = in_size * scale
    o = jnp.arange(out_size, dtype=jnp.float32)
    src = jnp.maximum((o + 0.5) / scale - 0.5, 0.0)
    lo = jnp.minimum(jnp.floor(src).astype(jnp.int32), in_size - 1)
    hi = jnp.minimum(lo + 1, in_size - 1)
    frac = src - lo.astype(jnp.float32)
    rows = jnp.arange(out_size)
    m = jnp.zeros((out_size, in_size), jnp.float32)
    m = m.at[rows, lo].add(1.0 - frac)
    m = m.at[rows, hi].add(frac)
    return m


def _band_matrix(w_dy, W):
    """(3, Cin, Cout) tap weights -> (W*Cin, W*Cout) banded width-conv matrix (SAME pad)."""
    KW, Cin, Cout = w_dy.shape
    dx = jnp.arange(W)[:, None] - jnp.arange(W)[None, :] + 1       # w_in - w_out + 1
    valid = (dx >= 0) & (dx < KW)
    blk = jnp.where(valid[:, :, None, None], w_dy[jnp.clip(dx, 0, KW - 1)], 0.0)
    return blk.transpose(0, 2, 1, 3).reshape(W * Cin, W * Cout)    # rows: (w_in, ci)


# ----------------------------------------------------------------------------
# Forward wrapper
# ----------------------------------------------------------------------------

def decoding_block_forward(skipped_nchw, upper_nchw, p, compute_dtype=jnp.bfloat16):
    """DecodingBlock.forward: NCHW in / NCHW out, one fused kernel per image."""
    N, Cs, H, W = skipped_nchw.shape
    _, Cu, Hu, Wu = upper_nchw.shape
    Co = p["w_up"].shape[1]       # == upper_c // 2 (module channel invariant)
    C1 = p["w1"].shape[-1]
    C2 = p["w2"].shape[-1]
    cdt = compute_dtype

    skipped = jnp.transpose(skipped_nchw, (0, 2, 3, 1)).reshape(N, H, W * Cs).astype(cdt)
    upper = jnp.transpose(upper_nchw, (0, 2, 3, 1)).reshape(N, Hu, Wu * Cu).astype(cdt)

    a_h = p["A_h"].astype(cdt)                                      # (H, Hu)
    kw = jnp.kron(p["A_w"].T, p["w_up"]).astype(cdt)                # (Wu*Cu, W*Co)
    b_up = jnp.tile(p["b_up"], W).reshape(1, W * Co).astype(jnp.float32)

    w1 = p["w1"]                                                    # (3,3,Cs+Co,C1) HWIO
    w1s = jnp.stack([_band_matrix(w1[dy, :, :Cs, :], W) for dy in range(3)]).astype(cdt)
    w1u = jnp.stack([_band_matrix(w1[dy, :, Cs:, :], W) for dy in range(3)]).astype(cdt)
    s1 = jnp.tile(p["s1"], W).reshape(1, W * C1).astype(jnp.float32)
    b1 = jnp.tile(p["bias1"], W).reshape(1, W * C1).astype(jnp.float32)
    w2 = jnp.stack([_band_matrix(p["w2"][dy], W) for dy in range(3)]).astype(cdt)
    s2 = jnp.tile(p["s2"], W).reshape(1, W * C2).astype(jnp.float32)
    b2 = jnp.tile(p["bias2"], W).reshape(1, W * C2).astype(jnp.float32)

    out = pl.pallas_call(
        decoding_block_kernel,
        out_shape=jax.ShapeDtypeStruct((N, H, W * C2), jnp.float32),
        grid_spec=pltpu.PrefetchScalarGridSpec(
            num_scalar_prefetch=0,
            grid=(N,),
            in_specs=[
                pl.BlockSpec((1, H, W * Cs), lambda n: (n, 0, 0)),
                pl.BlockSpec((1, Hu, Wu * Cu), lambda n: (n, 0, 0)),
                pl.BlockSpec((H, Hu), lambda n: (0, 0)),
                pl.BlockSpec((Wu * Cu, W * Co), lambda n: (0, 0)),
                pl.BlockSpec((1, W * Co), lambda n: (0, 0)),
                pl.BlockSpec((3, W * Cs, W * C1), lambda n: (0, 0, 0)),
                pl.BlockSpec((3, W * Co, W * C1), lambda n: (0, 0, 0)),
                pl.BlockSpec((1, W * C1), lambda n: (0, 0)),
                pl.BlockSpec((1, W * C1), lambda n: (0, 0)),
                pl.BlockSpec((3, W * C1, W * C2), lambda n: (0, 0, 0)),
                pl.BlockSpec((1, W * C2), lambda n: (0, 0)),
                pl.BlockSpec((1, W * C2), lambda n: (0, 0)),
            ],
            out_specs=pl.BlockSpec((1, H, W * C2), lambda n: (n, 0, 0)),
            scratch_shapes=[
                pltpu.VMEM((H + 2, W * Cs), cdt),
                pltpu.VMEM((H + 2, W * Co), cdt),
                pltpu.VMEM((H + 2, W * C1), cdt),
            ],
        ),
        compiler_params=pltpu.CompilerParams(
            dimension_semantics=("parallel",),       # megacore: one image per core
            vmem_limit_bytes=32 * 1024 * 1024,
        ),
    )(skipped, upper, a_h, kw, b_up, w1s, w1u, s1, b1, w2, s2, b2)

    # (N, H, W*C2) is flattened NHWC; tiny final NCHW permute is left to XLA.
    return jnp.transpose(out.reshape(N, H, W, C2), (0, 3, 1, 2))


# ----------------------------------------------------------------------------
# Parameter setup (deterministic, synthetic) + pure-JAX reference
# ----------------------------------------------------------------------------

def init_params(key, skipped_c, upper_c, out_c, hu, wu, scale=2, eps=1e-5):
    cin1 = skipped_c + upper_c // 2     # DoubleConvBlock input channels
    ks = jax.random.split(key, 14)
    p = {}
    p["A_h"] = _bilinear_matrix(hu, scale)
    p["A_w"] = _bilinear_matrix(wu, scale)
    p["w_up"] = 0.2 * jax.random.normal(ks[0], (upper_c, out_c), jnp.float32)
    p["b_up"] = 0.1 * jax.random.normal(ks[1], (out_c,), jnp.float32)

    def conv_bn(kw, kb, kg, kbe, km, kv, cin, cout):
        w = 0.2 * jax.random.normal(kw, (3, 3, cin, cout), jnp.float32)   # HWIO
        b = 0.1 * jax.random.normal(kb, (cout,), jnp.float32)
        gamma = 1.0 + 0.1 * jax.random.normal(kg, (cout,), jnp.float32)
        beta = 0.1 * jax.random.normal(kbe, (cout,), jnp.float32)
        rmean = 0.1 * jax.random.normal(km, (cout,), jnp.float32)
        rvar = 0.5 + jax.nn.sigmoid(jax.random.normal(kv, (cout,), jnp.float32))
        scale_c = gamma / jnp.sqrt(rvar + eps)
        bias_c = beta + scale_c * (b - rmean)
        return w, scale_c, bias_c

    p["w1"], p["s1"], p["bias1"] = conv_bn(*ks[2:8], cin1, out_c)
    p["w2"], p["s2"], p["bias2"] = conv_bn(*ks[8:14], out_c, out_c)
    return p


def ref_forward(skipped_nchw, upper_nchw, p):
    """Pure-JAX reference (XLA conv, high precision) for correctness checking."""
    skipped = jnp.transpose(skipped_nchw, (0, 2, 3, 1))
    upper = jnp.transpose(upper_nchw, (0, 2, 3, 1))
    up = jnp.einsum("ph,nhwc->npwc", p["A_h"], upper, precision="highest")
    up = jnp.einsum("qw,npwc->npqc", p["A_w"], up, precision="highest")
    up = jnp.einsum("npqc,cd->npqd", up, p["w_up"], precision="highest") + p["b_up"]
    x = jnp.concatenate([skipped, up], axis=-1)
    for wk, sk, bk in (("w1", "s1", "bias1"), ("w2", "s2", "bias2")):
        y = lax.conv_general_dilated(
            x, p[wk], window_strides=(1, 1), padding="SAME",
            dimension_numbers=("NHWC", "HWIO", "NHWC"),
            precision=lax.Precision.HIGHEST)
        x = jnp.maximum(y * p[sk] + p[bk], 0.0)
    return jnp.transpose(x, (0, 3, 1, 2))


# ----------------------------------------------------------------------------

if __name__ == "__main__":
    key = jax.random.PRNGKey(0)
    k1, k2, k3 = jax.random.split(key, 3)

    # DecodingBlock(skipped_in_channels=4, upper_in_channels=8, out_channels=4)
    N = 2
    skipped_c, upper_c, out_c = 4, 8, 4
    Hs = Ws = 16          # skipped-connection spatial size
    Hu = Wu = 8           # upper (coarser) spatial size; x2 bilinear -> 16

    skipped_input = jax.random.normal(k1, (N, skipped_c, Hs, Ws), jnp.float32)
    upper_input = jax.random.normal(k2, (N, upper_c, Hu, Wu), jnp.float32)
    params = init_params(k3, skipped_c, upper_c, out_c, Hu, Wu, scale=2)

    ref = ref_forward(skipped_input, upper_input, params)

    # f32 MXU operands.
    out_f32 = jax.block_until_ready(
        decoding_block_forward(skipped_input, upper_input, params,
                               compute_dtype=jnp.float32))
    assert out_f32.shape == (N, out_c, Hs, Ws), out_f32.shape
    err32 = float(jnp.max(jnp.abs(out_f32 - ref)))
    assert err32 < 5e-2, f"f32 max_err={err32}"

    # bf16 MXU operands (f32 accumulation + f32 epilogue): looser tolerance.
    out_bf16 = jax.block_until_ready(
        decoding_block_forward(skipped_input, upper_input, params,
                               compute_dtype=jnp.bfloat16))
    errbf = float(jnp.max(jnp.abs(out_bf16 - ref)))
    assert errbf < 2e-1, f"bf16 max_err={errbf}"

    print("KERNEL_OK")
</pallas_src>

<mosaic_0001>
module attributes {stable_mosaic.version = 11 : i64} {
  func.func @decoding_block_kernel(%arg0: i32, %arg1: memref<1x16x64xf32, #tpu.memory_space<vmem>>, %arg2: memref<1x8x64xf32, #tpu.memory_space<vmem>>, %arg3: memref<16x8xf32, #tpu.memory_space<vmem>>, %arg4: memref<64x64xf32, #tpu.memory_space<vmem>>, %arg5: memref<1x64xf32, #tpu.memory_space<vmem>>, %arg6: memref<3x64x64xf32, #tpu.memory_space<vmem>>, %arg7: memref<3x64x64xf32, #tpu.memory_space<vmem>>, %arg8: memref<1x64xf32, #tpu.memory_space<vmem>>, %arg9: memref<1x64xf32, #tpu.memory_space<vmem>>, %arg10: memref<3x64x64xf32, #tpu.memory_space<vmem>>, %arg11: memref<1x64xf32, #tpu.memory_space<vmem>>, %arg12: memref<1x64xf32, #tpu.memory_space<vmem>>, %arg13: memref<1x16x64xf32, #tpu.memory_space<vmem>>, %arg14: memref<18x64xf32, #tpu.memory_space<vmem>>, %arg15: memref<18x64xf32, #tpu.memory_space<vmem>>, %arg16: memref<18x64xf32, #tpu.memory_space<vmem>>) attributes {dimension_semantics = [#tpu.dimension_semantics<parallel>], iteration_bounds = array<i64: 2>, scalar_prefetch = 0 : i64, scratch_operands = 3 : i64, tpu.core_type = #tpu.core_type<tc>, window_params = [{transform_indices = @transform_0, window_bounds = array<i64: 1, 16, 64>}, {transform_indices = @transform_1, window_bounds = array<i64: 1, 8, 64>}, {pipeline_mode = #tpu.pipeline_mode<synchronous>, transform_indices = @transform_2, window_bounds = array<i64: 16, 8>}, {pipeline_mode = #tpu.pipeline_mode<synchronous>, transform_indices = @transform_3, window_bounds = array<i64: 64, 64>}, {pipeline_mode = #tpu.pipeline_mode<synchronous>, transform_indices = @transform_4, window_bounds = array<i64: 1, 64>}, {pipeline_mode = #tpu.pipeline_mode<synchronous>, transform_indices = @transform_5, window_bounds = array<i64: 3, 64, 64>}, {pipeline_mode = #tpu.pipeline_mode<synchronous>, transform_indices = @transform_6, window_bounds = array<i64: 3, 64, 64>}, {pipeline_mode = #tpu.pipeline_mode<synchronous>, transform_indices = @transform_7, window_bounds = array<i64: 1, 64>}, {pipeline_mode = #tpu.pipeline_mode<synchronous>, transform_indices = @transform_8, window_bounds = array<i64: 1, 64>}, {pipeline_mode = #tpu.pipeline_mode<synchronous>, transform_indices = @transform_9, window_bounds = array<i64: 3, 64, 64>}, {pipeline_mode = #tpu.pipeline_mode<synchronous>, transform_indices = @transform_10, window_bounds = array<i64: 1, 64>}, {pipeline_mode = #tpu.pipeline_mode<synchronous>, transform_indices = @transform_11, window_bounds = array<i64: 1, 64>}, {transform_indices = @transform_12, window_bounds = array<i64: 1, 16, 64>}]} {
    %c0 = arith.constant 0 : index
    %c0_0 = arith.constant 0 : index
    %0 = vector.load %arg3[%c0, %c0_0] : memref<16x8xf32, #tpu.memory_space<vmem>>, vector<16x8xf32>
    %c0_1 = arith.constant 0 : index
    %c0_2 = arith.constant 0 : index
    %c0_3 = arith.constant 0 : index
    %1 = vector.load %arg2[%c0_1, %c0_2, %c0_3] : memref<1x8x64xf32, #tpu.memory_space<vmem>>, vector<1x8x64xf32>
    %2 = vector.shape_cast %1 : vector<1x8x64xf32> to vector<8x64xf32>
    %cst = arith.constant dense<0.000000e+00> : vector<16x64xf32>
    %3 = tpu.matmul %0, %2, %cst {dimension_numbers = #tpu.dot_dimension_numbers<[1], [0], [0], [1], [0, 0, 1, 1], [], []>} : vector<16x8xf32>, vector<8x64xf32>, vector<16x64xf32> -> vector<16x64xf32>
    %c0_4 = arith.constant 0 : index
    %c0_5 = arith.constant 0 : index
    %4 = vector.load %arg4[%c0_4, %c0_5] : memref<64x64xf32, #tpu.memory_space<vmem>>, vector<64x64xf32>
    %cst_6 = arith.constant dense<0.000000e+00> : vector<16x64xf32>
    %5 = tpu.matmul %3, %4, %cst_6 {dimension_numbers = #tpu.dot_dimension_numbers<[1], [0], [0], [1], [0, 0, 1, 1], [], []>} : vector<16x64xf32>, vector<64x64xf32>, vector<16x64xf32> -> vector<16x64xf32>
    %c0_7 = arith.constant 0 : index
    %c0_8 = arith.constant 0 : index
    %6 = vector.load %arg5[%c0_7, %c0_8] : memref<1x64xf32, #tpu.memory_space<vmem>>, vector<1x64xf32>
    %7 = vector.broadcast %6 : vector<1x64xf32> to vector<16x64xf32>
    %8 = arith.addf %5, %7 : vector<16x64xf32>
    %cst_9 = arith.constant 0.000000e+00 : f32
    %9 = vector.broadcast %cst_9 : f32 to vector<1x64xf32>
    %c0_10 = arith.constant 0 : index
    %c0_11 = arith.constant 0 : index
    %10 = vector.load %arg14[%c0_10, %c0_11] : memref<18x64xf32, #tpu.memory_space<vmem>>, vector<1x64xf32>
    tpu.vector_store %arg14[%c0_10, %c0_11], %9 {strides = array<i32>} : memref<18x64xf32, #tpu.memory_space<vmem>>, vector<1x64xf32>,
    %cst_12 = arith.constant 0.000000e+00 : f32
    %11 = vector.broadcast %cst_12 : f32 to vector<1x64xf32>
    %c17 = arith.constant 17 : index
    %c0_13 = arith.constant 0 : index
    %12 = vector.load %arg14[%c17, %c0_13] : memref<18x64xf32, #tpu.memory_space<vmem>>, vector<1x64xf32>
    tpu.vector_store %arg14[%c17, %c0_13], %11 {strides = array<i32>} : memref<18x64xf32, #tpu.memory_space<vmem>>, vector<1x64xf32>,
    %cst_14 = arith.constant 0.000000e+00 : f32
    %13 = vector.broadcast %cst_14 : f32 to vector<1x64xf32>
    %c0_15 = arith.constant 0 : index
    %c0_16 = arith.constant 0 : index
    %14 = vector.load %arg15[%c0_15, %c0_16] : memref<18x64xf32, #tpu.memory_space<vmem>>, vector<1x64xf32>
    tpu.vector_store %arg15[%c0_15, %c0_16], %13 {strides = array<i32>} : memref<18x64xf32, #tpu.memory_space<vmem>>, vector<1x64xf32>,
    %cst_17 = arith.constant 0.000000e+00 : f32
    %15 = vector.broadcast %cst_17 : f32 to vector<1x64xf32>
    %c17_18 = arith.constant 17 : index
    %c0_19 = arith.constant 0 : index
    %16 = vector.load %arg15[%c17_18, %c0_19] : memref<18x64xf32, #tpu.memory_space<vmem>>, vector<1x64xf32>
    tpu.vector_store %arg15[%c17_18, %c0_19], %15 {strides = array<i32>} : memref<18x64xf32, #tpu.memory_space<vmem>>, vector<1x64xf32>,
    %cst_20 = arith.constant 0.000000e+00 : f32
    %17 = vector.broadcast %cst_20 : f32 to vector<1x64xf32>
    %c0_21 = arith.constant 0 : index
    %c0_22 = arith.constant 0 : index
    %18 = vector.load %arg16[%c0_21, %c0_22] : memref<18x64xf32, #tpu.memory_space<vmem>>, vector<1x64xf32>
    tpu.vector_store %arg16[%c0_21, %c0_22], %17 {strides = array<i32>} : memref<18x64xf32, #tpu.memory_space<vmem>>, vector<1x64xf32>,
    %cst_23 = arith.constant 0.000000e+00 : f32
    %19 = vector.broadcast %cst_23 : f32 to vector<1x64xf32>
    %c17_24 = arith.constant 17 : index
    %c0_25 = arith.constant 0 : index
    %20 = vector.load %arg16[%c17_24, %c0_25] : memref<18x64xf32, #tpu.memory_space<vmem>>, vector<1x64xf32>
    tpu.vector_store %arg16[%c17_24, %c0_25], %19 {strides = array<i32>} : memref<18x64xf32, #tpu.memory_space<vmem>>, vector<1x64xf32>,
    %c0_26 = arith.constant 0 : index
    %c0_27 = arith.constant 0 : index
    %c0_28 = arith.constant 0 : index
    %21 = vector.load %arg1[%c0_26, %c0_27, %c0_28] : memref<1x16x64xf32, #tpu.memory_space<vmem>>, vector<1x16x64xf32>
    %22 = vector.shape_cast %21 : vector<1x16x64xf32> to vector<16x64xf32>
    %c1 = arith.constant 1 : index
    %c0_29 = arith.constant 0 : index
    %23 = vector.load %arg14[%c1, %c0_29] : memref<18x64xf32, #tpu.memory_space<vmem>>, vector<16x64xf32>
    tpu.vector_store %arg14[%c1, %c0_29], %22 {strides = array<i32>} : memref<18x64xf32, #tpu.memory_space<vmem>>, vector<16x64xf32>,
    %c1_30 = arith.constant 1 : index
    %c0_31 = arith.constant 0 : index
    %24 = vector.load %arg15[%c1_30, %c0_31] : memref<18x64xf32, #tpu.memory_space<vmem>>, vector<16x64xf32>
    tpu.vector_store %arg15[%c1_30, %c0_31], %8 {strides = array<i32>} : memref<18x64xf32, #tpu.memory_space<vmem>>, vector<16x64xf32>,
    %cst_32 = arith.constant 0.000000e+00 : f32
    %25 = vector.broadcast %cst_32 : f32 to vector<16x64xf32>
    %c0_33 = arith.constant 0 : index
    %c0_34 = arith.constant 0 : index
    %26 = vector.load %arg14[%c0_33, %c0_34] : memref<18x64xf32, #tpu.memory_space<vmem>>, vector<16x64xf32>
    %c0_35 = arith.constant 0 : index
    %c0_36 = arith.constant 0 : index
    %c0_37 = arith.constant 0 : index
    %27 = vector.load %arg6[%c0_35, %c0_36, %c0_37] : memref<3x64x64xf32, #tpu.memory_space<vmem>>, vector<1x64x64xf32>
    %28 = vector.shape_cast %27 : vector<1x64x64xf32> to vector<64x64xf32>
    %cst_38 = arith.constant dense<0.000000e+00> : vector<16x64xf32>
    %29 = tpu.matmul %26, %28, %cst_38 {dimension_numbers = #tpu.dot_dimension_numbers<[1], [0], [0], [1], [0, 0, 1, 1], [], []>} : vector<16x64xf32>, vector<64x64xf32>, vector<16x64xf32> -> vector<16x64xf32>
    %30 = arith.addf %25, %29 : vector<16x64xf32>
    %c0_39 = arith.constant 0 : index
    %c0_40 = arith.constant 0 : index
    %31 = vector.load %arg15[%c0_39, %c0_40] : memref<18x64xf32, #tpu.memory_space<vmem>>, vector<16x64xf32>
    %c0_41 = arith.constant 0 : index
    %c0_42 = arith.constant 0 : index
    %c0_43 = arith.constant 0 : index
    %32 = vector.load %arg7[%c0_41, %c0_42, %c0_43] : memref<3x64x64xf32, #tpu.memory_space<vmem>>, vector<1x64x64xf32>
    %33 = vector.shape_cast %32 : vector<1x64x64xf32> to vector<64x64xf32>
    %cst_44 = arith.constant dense<0.000000e+00> : vector<16x64xf32>
    %34 = tpu.matmul %31, %33, %cst_44 {dimension_numbers = #tpu.dot_dimension_numbers<[1], [0], [0], [1], [0, 0, 1, 1], [], []>} : vector<16x64xf32>, vector<64x64xf32>, vector<16x64xf32> -> vector<16x64xf32>
    %35 = arith.addf %30, %34 : vector<16x64xf32>
    %c1_45 = arith.constant 1 : index
    %c0_46 = arith.constant 0 : index
    %36 = vector.load %arg14[%c1_45, %c0_46] : memref<18x64xf32, #tpu.memory_space<vmem>>, vector<16x64xf32>
    %c1_47 = arith.constant 1 : index
    %c0_48 = arith.constant 0 : index
    %c0_49 = arith.constant 0 : index
    %37 = vector.load %arg6[%c1_47, %c0_48, %c0_49] : memref<3x64x64xf32, #tpu.memory_space<vmem>>, vector<1x64x64xf32>
    %38 = vector.shape_cast %37 : vector<1x64x64xf32> to vector<64x64xf32>
    %cst_50 = arith.constant dense<0.000000e+00> : vector<16x64xf32>
    %39 = tpu.matmul %36, %38, %cst_50 {dimension_numbers = #tpu.dot_dimension_numbers<[1], [0], [0], [1], [0, 0, 1, 1], [], []>} : vector<16x64xf32>, vector<64x64xf32>, vector<16x64xf32> -> vector<16x64xf32>
    %40 = arith.addf %35, %39 : vector<16x64xf32>
    %c1_51 = arith.constant 1 : index
    %c0_52 = arith.constant 0 : index
    %41 = vector.load %arg15[%c1_51, %c0_52] : memref<18x64xf32, #tpu.memory_space<vmem>>, vector<16x64xf32>
    %c1_53 = arith.constant 1 : index
    %c0_54 = arith.constant 0 : index
    %c0_55 = arith.constant 0 : index
    %42 = vector.load %arg7[%c1_53, %c0_54, %c0_55] : memref<3x64x64xf32, #tpu.memory_space<vmem>>, vector<1x64x64xf32>
    %43 = vector.shape_cast %42 : vector<1x64x64xf32> to vector<64x64xf32>
    %cst_56 = arith.constant dense<0.000000e+00> : vector<16x64xf32>
    %44 = tpu.matmul %41, %43, %cst_56 {dimension_numbers = #tpu.dot_dimension_numbers<[1], [0], [0], [1], [0, 0, 1, 1], [], []>} : vector<16x64xf32>, vector<64x64xf32>, vector<16x64xf32> -> vector<16x64xf32>
    %45 = arith.addf %40, %44 : vector<16x64xf32>
    %c2 = arith.constant 2 : index
    %c0_57 = arith.constant 0 : index
    %46 = vector.load %arg14[%c2, %c0_57] : memref<18x64xf32, #tpu.memory_space<vmem>>, vector<16x64xf32>
    %c2_58 = arith.constant 2 : index
    %c0_59 = arith.constant 0 : index
    %c0_60 = arith.constant 0 : index
    %47 = vector.load %arg6[%c2_58, %c0_59, %c0_60] : memref<3x64x64xf32, #tpu.memory_space<vmem>>, vector<1x64x64xf32>
    %48 = vector.shape_cast %47 : vector<1x64x64xf32> to vector<64x64xf32>
    %cst_61 = arith.constant dense<0.000000e+00> : vector<16x64xf32>
    %49 = tpu.matmul %46, %48, %cst_61 {dimension_numbers = #tpu.dot_dimension_numbers<[1], [0], [0], [1], [0, 0, 1, 1], [], []>} : vector<16x64xf32>, vector<64x64xf32>, vector<16x64xf32> -> vector<16x64xf32>
    %50 = arith.addf %45, %49 : vector<16x64xf32>
    %c2_62 = arith.constant 2 : index
    %c0_63 = arith.constant 0 : index
    %51 = vector.load %arg15[%c2_62, %c0_63] : memref<18x64xf32, #tpu.memory_space<vmem>>, vector<16x64xf32>
    %c2_64 = arith.constant 2 : index
    %c0_65 = arith.constant 0 : index
    %c0_66 = arith.constant 0 : index
    %52 = vector.load %arg7[%c2_64, %c0_65, %c0_66] : memref<3x64x64xf32, #tpu.memory_space<vmem>>, vector<1x64x64xf32>
    %53 = vector.shape_cast %52 : vector<1x64x64xf32> to vector<64x64xf32>
    %cst_67 = arith.constant dense<0.000000e+00> : vector<16x64xf32>
    %54 = tpu.matmul %51, %53, %cst_67 {dimension_numbers = #tpu.dot_dimension_numbers<[1], [0], [0], [1], [0, 0, 1, 1], [], []>} : vector<16x64xf32>, vector<64x64xf32>, vector<16x64xf32> -> vector<16x64xf32>
    %55 = arith.addf %50, %54 : vector<16x64xf32>
    %c0_68 = arith.constant 0 : index
    %c0_69 = arith.constant 0 : index
    %56 = vector.load %arg8[%c0_68, %c0_69] : memref<1x64xf32, #tpu.memory_space<vmem>>, vector<1x64xf32>
    %57 = vector.broadcast %56 : vector<1x64xf32> to vector<16x64xf32>
    %58 = arith.mulf %55, %57 : vector<16x64xf32>
    %c0_70 = arith.constant 0 : index
    %c0_71 = arith.constant 0 : index
    %59 = vector.load %arg9[%c0_70, %c0_71] : memref<1x64xf32, #tpu.memory_space<vmem>>, vector<1x64xf32>
    %60 = vector.broadcast %59 : vector<1x64xf32> to vector<16x64xf32>
    %61 = arith.addf %58, %60 : vector<16x64xf32>
    %cst_72 = arith.constant 0.000000e+00 : f32
    %62 = vector.broadcast %cst_72 : f32 to vector<16x64xf32>
    %63 = arith.maximumf %61, %62 : vector<16x64xf32>
    %c1_73 = arith.constant 1 : index
    %c0_74 = arith.constant 0 : index
    %64 = vector.load %arg16[%c1_73, %c0_74] : memref<18x64xf32, #tpu.memory_space<vmem>>, vector<16x64xf32>
    tpu.vector_store %arg16[%c1_73, %c0_74], %63 {strides = array<i32>} : memref<18x64xf32, #tpu.memory_space<vmem>>, vector<16x64xf32>,
    %cst_75 = arith.constant 0.000000e+00 : f32
    %65 = vector.broadcast %cst_75 : f32 to vector<16x64xf32>
    %c0_76 = arith.constant 0 : index
    %c0_77 = arith.constant 0 : index
    %66 = vector.load %arg16[%c0_76, %c0_77] : memref<18x64xf32, #tpu.memory_space<vmem>>, vector<16x64xf32>
    %c0_78 = arith.constant 0 : index
    %c0_79 = arith.constant 0 : index
    %c0_80 = arith.constant 0 : index
    %67 = vector.load %arg10[%c0_78, %c0_79, %c0_80] : memref<3x64x64xf32, #tpu.memory_space<vmem>>, vector<1x64x64xf32>
    %68 = vector.shape_cast %67 : vector<1x64x64xf32> to vector<64x64xf32>
    %cst_81 = arith.constant dense<0.000000e+00> : vector<16x64xf32>
    %69 = tpu.matmul %66, %68, %cst_81 {dimension_numbers = #tpu.dot_dimension_numbers<[1], [0], [0], [1], [0, 0, 1, 1], [], []>} : vector<16x64xf32>, vector<64x64xf32>, vector<16x64xf32> -> vector<16x64xf32>
    %70 = arith.addf %65, %69 : vector<16x64xf32>
    %c1_82 = arith.constant 1 : index
    %c0_83 = arith.constant 0 : index
    %71 = vector.load %arg16[%c1_82, %c0_83] : memref<18x64xf32, #tpu.memory_space<vmem>>, vector<16x64xf32>
    %c1_84 = arith.constant 1 : index
    %c0_85 = arith.constant 0 : index
    %c0_86 = arith.constant 0 : index
    %72 = vector.load %arg10[%c1_84, %c0_85, %c0_86] : memref<3x64x64xf32, #tpu.memory_space<vmem>>, vector<1x64x64xf32>
    %73 = vector.shape_cast %72 : vector<1x64x64xf32> to vector<64x64xf32>
    %cst_87 = arith.constant dense<0.000000e+00> : vector<16x64xf32>
    %74 = tpu.matmul %71, %73, %cst_87 {dimension_numbers = #tpu.dot_dimension_numbers<[1], [0], [0], [1], [0, 0, 1, 1], [], []>} : vector<16x64xf32>, vector<64x64xf32>, vector<16x64xf32> -> vector<16x64xf32>
    %75 = arith.addf %70, %74 : vector<16x64xf32>
    %c2_88 = arith.constant 2 : index
    %c0_89 = arith.constant 0 : index
    %76 = vector.load %arg16[%c2_88, %c0_89] : memref<18x64xf32, #tpu.memory_space<vmem>>, vector<16x64xf32>
    %c2_90 = arith.constant 2 : index
    %c0_91 = arith.constant 0 : index
    %c0_92 = arith.constant 0 : index
    %77 = vector.load %arg10[%c2_90, %c0_91, %c0_92] : memref<3x64x64xf32, #tpu.memory_space<vmem>>, vector<1x64x64xf32>
    %78 = vector.shape_cast %77 : vector<1x64x64xf32> to vector<64x64xf32>
    %cst_93 = arith.constant dense<0.000000e+00> : vector<16x64xf32>
    %79 = tpu.matmul %76, %78, %cst_93 {dimension_numbers = #tpu.dot_dimension_numbers<[1], [0], [0], [1], [0, 0, 1, 1], [], []>} : vector<16x64xf32>, vector<64x64xf32>, vector<16x64xf32> -> vector<16x64xf32>
    %80 = arith.addf %75, %79 : vector<16x64xf32>
    %c0_94 = arith.constant 0 : index
    %c0_95 = arith.constant 0 : index
    %81 = vector.load %arg11[%c0_94, %c0_95] : memref<1x64xf32, #tpu.memory_space<vmem>>, vector<1x64xf32>
    %82 = vector.broadcast %81 : vector<1x64xf32> to vector<16x64xf32>
    %83 = arith.mulf %80, %82 : vector<16x64xf32>
    %c0_96 = arith.constant 0 : index
    %c0_97 = arith.constant 0 : index
    %84 = vector.load %arg12[%c0_96, %c0_97] : memref<1x64xf32, #tpu.memory_space<vmem>>, vector<1x64xf32>
    %85 = vector.broadcast %84 : vector<1x64xf32> to vector<16x64xf32>
    %86 = arith.addf %83, %85 : vector<16x64xf32>
    %cst_98 = arith.constant 0.000000e+00 : f32
    %87 = vector.broadcast %cst_98 : f32 to vector<16x64xf32>
    %88 = arith.maximumf %86, %87 : vector<16x64xf32>
    %c0_99 = arith.constant 0 : index
    %c0_100 = arith.constant 0 : index
    %c0_101 = arith.constant 0 : index
    %89 = vector.load %arg13[%c0_99, %c0_100, %c0_101] : memref<1x16x64xf32, #tpu.memory_space<vmem>>, vector<1x16x64xf32>
    %90 = vector.shape_cast %89 : vector<1x16x64xf32> to vector<16x64xf32>
    %91 = vector.shape_cast %88 : vector<16x64xf32> to vector<1x16x64xf32>
    tpu.vector_store %arg13[%c0_99, %c0_100, %c0_101], %91 {strides = array<i32>} : memref<1x16x64xf32, #tpu.memory_space<vmem>>, vector<1x16x64xf32>,
    return
  }
  func.func @transform_0(%arg0: i32) -> (i32, i32, i32) {
    %c0_i32 = arith.constant 0 : i32
    %c0_i32_0 = arith.constant 0 : i32
    %c0_i32_1 = arith.constant 0 : i32
    return %arg0, %c0_i32, %c0_i32_0 : i32, i32, i32
  }
  func.func @transform_1(%arg0: i32) -> (i32, i32, i32) {
    %c0_i32 = arith.constant 0 : i32
    %c0_i32_0 = arith.constant 0 : i32
    %c0_i32_1 = arith.constant 0 : i32
    return %arg0, %c0_i32, %c0_i32_0 : i32, i32, i32
  }
  func.func @transform_2(%arg0: i32) -> (i32, i32) {
    %c0_i32 = arith.constant 0 : i32
    %c0_i32_0 = arith.constant 0 : i32
    %c0_i32_1 = arith.constant 0 : i32
    return %c0_i32, %c0_i32_0 : i32, i32
  }
  func.func @transform_3(%arg0: i32) -> (i32, i32) {
    %c0_i32 = arith.constant 0 : i32
    %c0_i32_0 = arith.constant 0 : i32
    %c0_i32_1 = arith.constant 0 : i32
    return %c0_i32, %c0_i32_0 : i32, i32
  }
  func.func @transform_4(%arg0: i32) -> (i32, i32) {
    %c0_i32 = arith.constant 0 : i32
    %c0_i32_0 = arith.constant 0 : i32
    %c0_i32_1 = arith.constant 0 : i32
    return %c0_i32, %c0_i32_0 : i32, i32
  }
  func.func @transform_5(%arg0: i32) -> (i32, i32, i32) {
    %c0_i32 = arith.constant 0 : i32
    %c0_i32_0 = arith.constant 0 : i32
    %c0_i32_1 = arith.constant 0 : i32
    %c0_i32_2 = arith.constant 0 : i32
    return %c0_i32, %c0_i32_0, %c0_i32_1 : i32, i32, i32
  }
  func.func @transform_6(%arg0: i32) -> (i32, i32, i32) {
    %c0_i32 = arith.constant 0 : i32
    %c0_i32_0 = arith.constant 0 : i32
    %c0_i32_1 = arith.constant 0 : i32
    %c0_i32_2 = arith.constant 0 : i32
    return %c0_i32, %c0_i32_0, %c0_i32_1 : i32, i32, i32
  }
  func.func @transform_7(%arg0: i32) -> (i32, i32) {
    %c0_i32 = arith.constant 0 : i32
    %c0_i32_0 = arith.constant 0 : i32
    %c0_i32_1 = arith.constant 0 : i32
    return %c0_i32, %c0_i32_0 : i32, i32
  }
  func.func @transform_8(%arg0: i32) -> (i32, i32) {
    %c0_i32 = arith.constant 0 : i32
    %c0_i32_0 = arith.constant 0 : i32
    %c0_i32_1 = arith.constant 0 : i32
    return %c0_i32, %c0_i32_0 : i32, i32
  }
  func.func @transform_9(%arg0: i32) -> (i32, i32, i32) {
    %c0_i32 = arith.constant 0 : i32
    %c0_i32_0 = arith.constant 0 : i32
    %c0_i32_1 = arith.constant 0 : i32
    %c0_i32_2 = arith.constant 0 : i32
    return %c0_i32, %c0_i32_0, %c0_i32_1 : i32, i32, i32
  }
  func.func @transform_10(%arg0: i32) -> (i32, i32) {
    %c0_i32 = arith.constant 0 : i32
    %c0_i32_0 = arith.constant 0 : i32
    %c0_i32_1 = arith.constant 0 : i32
    return %c0_i32, %c0_i32_0 : i32, i32
  }
  func.func @transform_11(%arg0: i32) -> (i32, i32) {
    %c0_i32 = arith.constant 0 : i32
    %c0_i32_0 = arith.constant 0 : i32
    %c0_i32_1 = arith.constant 0 : i32
    return %c0_i32, %c0_i32_0 : i32, i32
  }
  func.func @transform_12(%arg0: i32) -> (i32, i32, i32) {
    %c0_i32 = arith.constant 0 : i32
    %c0_i32_0 = arith.constant 0 : i32
    %c0_i32_1 = arith.constant 0 : i32
    return %arg0, %c0_i32, %c0_i32_0 : i32, i32, i32
  }
}

</mosaic_0001>

<llo_original>
// kernel: tpu_custom_call.1
$region0: #{tpu_custom_call.1}
  #allocation0 [shape = 'u32[]', space=smem, size = 0x4, offset = 0x4, fixed_abs, tag = 'smem constant byte address 0x4 - core index']
  #allocation1 [shape = 'u32[144,128]{1,0:T(1,128)}', space=vmem, size = 0x12000, scoped, tag = 'internal scratch']
  #allocation2 [shape = 'f32[18,64]{1,0:T(8,128)}', space=vmem, size = 0x3000, scoped, tag = 'scratch operand']
  #allocation3 [shape = 'f32[18,64]{1,0:T(8,128)}', space=vmem, size = 0x3000, scoped, tag = 'scratch operand']
  #allocation4 [shape = 'f32[18,64]{1,0:T(8,128)}', space=vmem, size = 0x3000, scoped, tag = 'scratch operand']
  %s0 = inlined_call_operand.hbm [shape: f32[2,16,64], index: 0, kind: input, shape index: {}]
  %s1 = inlined_call_operand.vmem [shape: f32[2,8,64], index: 1, kind: input, shape index: {}]
  %s2 = inlined_call_operand.vmem [shape: f32[16,8], index: 2, kind: input, shape index: {}]
  %s3 = inlined_call_operand.hbm [shape: f32[64,64], index: 3, kind: input, shape index: {}]
  %s4 = inlined_call_operand.vmem [shape: f32[1,64], index: 4, kind: input, shape index: {}]
  %s5 = inlined_call_operand.hbm [shape: f32[3,64,64], index: 5, kind: input, shape index: {}]
  %s6 = inlined_call_operand.hbm [shape: f32[3,64,64], index: 6, kind: input, shape index: {}]
  %s7 = inlined_call_operand.vmem [shape: f32[1,64], index: 7, kind: input, shape index: {}]
  %s8 = inlined_call_operand.vmem [shape: f32[1,64], index: 8, kind: input, shape index: {}]
  %s9 = inlined_call_operand.hbm [shape: f32[3,64,64], index: 9, kind: input, shape index: {}]
  %s10 = inlined_call_operand.vmem [shape: f32[1,64], index: 10, kind: input, shape index: {}]
  %s11 = inlined_call_operand.vmem [shape: f32[1,64], index: 11, kind: input, shape index: {}]
  %s12 = inlined_call_operand.hbm [shape: f32[2,16,64], index: 12, kind: output, shape index: {}]
  %s13 = sld [smem:[#allocation0]]
  $region101: #{tpu_custom_call.1} parent=0
    _
  %s15 = ssub.s32 1, %s13
  %s16 = scalar_select 0, %s15, %s13
  $region1: #{tpu_custom_call.1} parent=0
    #allocation5 [shape = 'u8[16384]{0}', space=vmem, size = 0x4000, scoped, tag = 'input window, operand 0']
    #allocation6 [shape = 's32[2]{0}', space=sflag, size = 0x8, scoped, tag = 'scoped memory for tpu_custom_call.1']
    #allocation7 [shape = 's32[2]{0}', space=sflag, size = 0x8, scoped, tag = 'scoped memory for tpu_custom_call.1']
    #allocation8 [shape = 'u8[32768]{0}', space=vmem, size = 0x8000, scoped, tag = 'input window, operand 3, single buffered']
    #allocation9 [shape = 's32[1]{0}', space=sflag, size = 0x4, scoped, tag = 'scoped memory for tpu_custom_call.1']
    #allocation10 [shape = 'u8[98304]{0}', space=vmem, size = 0x18000, scoped, tag = 'input window, operand 5, single buffered']
    #allocation11 [shape = 'u8[98304]{0}', space=vmem, size = 0x18000, scoped, tag = 'input window, operand 6, single buffered']
    #allocation12 [shape = 's32[1]{0}', space=sflag, size = 0x4, scoped, tag = 'scoped memory for tpu_custom_call.1']
    #allocation13 [shape = 'u8[98304]{0}', space=vmem, size = 0x18000, scoped, tag = 'input window, operand 9, single buffered']
    #allocation14 [shape = 'u8[16384]{0}', space=vmem, size = 0x4000, scoped, tag = 'output window, operand 0']
    %17 = vsyncpa [#allocation6], 0
    %s18 = scalar_lea.sflag [#allocation6], 1
    %19 = vsyncpa %s18, 0
    %20 = vsyncpa [#allocation9], 0
    %21 = vsyncpa [#allocation12], 0
    %22 = vsyncpa [#allocation7], 0
    %s23 = scalar_lea.sflag [#allocation7], 1
    %24 = vsyncpa %s23, 0
    loop: start=0, step=1, limit=4
    $region2: #{tpu_custom_call.1} parent=1 // loop_pre_header
      _
    $region3: #{tpu_custom_call.1} parent=1 // loop_header
      %s26 = sphi 0, %s30
      %p27 = scmp.ge.s32.totalorder %s26, 4
      %s36 = sphi 0, %s38
      %s39 = sphi 0, %s36
      %s40 = sphi 0, %s39
      %s56 = sphi 0, %s40
      %s62 = sphi 0, %s64
      %s65 = sphi 0, %s62
      %s66 = sphi 0, %s65
      %s82 = sphi 0, %s66
      %s86 = sphi 0, %s86
      %s88 = sphi 0, %s86
      %s89 = sphi 0, %s88
      %s103 = sphi 0, %s89
      %s107 = sphi 0, %s107
      %s109 = sphi 0, %s107
      %s110 = sphi 0, %s109
      %s124 = sphi 0, %s110
      %s128 = sphi 0, %s128
      %s130 = sphi 0, %s128
      %s131 = sphi 0, %s130
      %s145 = sphi 0, %s131
      %s149 = sphi 0, %s149
      %s151 = sphi 0, %s149
      %s152 = sphi 0, %s151
      %s166 = sphi 0, %s152
      %s170 = sphi 0, %s170
      %s172 = sphi 0, %s170
      %s173 = sphi 0, %s172
      %s187 = sphi 0, %s173
      %s191 = sphi 0, %s191
      %s193 = sphi 0, %s191
      %s194 = sphi 0, %s193
      %s208 = sphi 0, %s194
      %s212 = sphi 0, %s212
      %s214 = sphi 0, %s212
      %s215 = sphi 0, %s214
      %s229 = sphi 0, %s215
      %s233 = sphi 0, %s233
      %s235 = sphi 0, %s233
      %s236 = sphi 0, %s235
      %s250 = sphi 0, %s236
      %s254 = sphi 0, %s254
      %s256 = sphi 0, %s254
      %s257 = sphi 0, %s256
      %s271 = sphi 0, %s257
      %s275 = sphi 0, %s275
      %s277 = sphi 0, %s275
      %s278 = sphi 0, %s277
      %s292 = sphi 0, %s278
      %s298 = sphi 0, %s300
      %s301 = sphi 0, %s298
      %s302 = sphi 0, %s301
      %s318 = sphi 0, %s302
    $region4: #{tpu_custom_call.1} parent=1 // loop_header_branch
      %29 = sbr.rel (%p27) target = $region8
    $region5: #{tpu_custom_call.1} parent=1 // loop_body
      %s31 = ssub.s32 %s26, 1
      %s32 = ssub.s32 %s26, 2
      %s33 = sadd.s32 %s26, 1
      %s34 = ssub.s32 %s26, %s33
      %p35 = scmp.eq.s32.totalorder %s34, 0
      %s37 = sadd.s32 %s36, 1
      %s38 = scalar_select %p35, %s36, %s37
      %p41 = pneg %p35
      %p42 = scmp.eq.s32.totalorder %s26, 1
      %p43 = por %p41, %p42
      %p44 = scmp.ne.s32.totalorder %s36, %s39
      %p45 = scmp.eq.s32.totalorder %s26, 0
      %p46 = por %p44, %p45
      %p47 = scmp.ne.s32.totalorder %s36, %s39
      %p48 = scmp.eq.s32.totalorder %s31, 1
      %p49 = por %p47, %p48
      %p50 = scmp.ne.s32.totalorder %s39, %s40
      %p51 = scmp.eq.s32.totalorder %s31, 0
      %p52 = por %p50, %p51
      %p53 = scmp.ne.s32.totalorder %s39, %s40
      %p54 = scmp.eq.s32.totalorder %s32, 1
      %p55 = por %p53, %p54
      %p57 = scmp.ne.s32.totalorder %s40, %s56
      %p58 = scmp.eq.s32.totalorder %s32, 0
      %p59 = por %p57, %p58
      %s60 = ssub.s32 %s26, %s33
      %p61 = scmp.eq.s32.totalorder %s60, 0
      %s63 = sadd.s32 %s62, 1
      %s64 = scalar_select %p61, %s62, %s63
      %p67 = pneg %p61
      %p68 = scmp.eq.s32.totalorder %s26, 1
      %p69 = por %p67, %p68
      %p70 = scmp.ne.s32.totalorder %s62, %s65
      %p71 = scmp.eq.s32.totalorder %s26, 0
      %p72 = por %p70, %p71
      %p73 = scmp.ne.s32.totalorder %s62, %s65
      %p74 = scmp.eq.s32.totalorder %s31, 1
      %p75 = por %p73, %p74
      %p76 = scmp.ne.s32.totalorder %s65, %s66
      %p77 = scmp.eq.s32.totalorder %s31, 0
      %p78 = por %p76, %p77
      %p79 = scmp.ne.s32.totalorder %s65, %s66
      %p80 = scmp.eq.s32.totalorder %s32, 1
      %p81 = por %p79, %p80
      %p83 = scmp.ne.s32.totalorder %s66, %s82
      %p84 = scmp.eq.s32.totalorder %s32, 0
      %p85 = por %p83, %p84
      %s87 = sadd.s32 %s86, 1
      %p90 = scmp.eq.s32.totalorder %s26, 1
      %p91 = scmp.ne.s32.totalorder %s86, %s88
      %p92 = scmp.eq.s32.totalorder %s26, 0
      %p93 = por %p91, %p92
      %p94 = scmp.ne.s32.totalorder %s86, %s88
      %p95 = scmp.eq.s32.totalorder %s31, 1
      %p96 = por %p94, %p95
      %p97 = scmp.ne.s32.totalorder %s88, %s89
      %p98 = scmp.eq.s32.totalorder %s31, 0
      %p99 = por %p97, %p98
      %p100 = scmp.ne.s32.totalorder %s88, %s89
      %p101 = scmp.eq.s32.totalorder %s32, 1
      %p102 = por %p100, %p101
      %p104 = scmp.ne.s32.totalorder %s89, %s103
      %p105 = scmp.eq.s32.totalorder %s32, 0
      %p106 = por %p104, %p105
      %s108 = sadd.s32 %s107, 1
      %p111 = scmp.eq.s32.totalorder %s26, 1
      %p112 = scmp.ne.s32.totalorder %s107, %s109
      %p113 = scmp.eq.s32.totalorder %s26, 0
      %p114 = por %p112, %p113
      %p115 = scmp.ne.s32.totalorder %s107, %s109
      %p116 = scmp.eq.s32.totalorder %s31, 1
      %p117 = por %p115, %p116
      %p118 = scmp.ne.s32.totalorder %s109, %s110
      %p119 = scmp.eq.s32.totalorder %s31, 0
      %p120 = por %p118, %p119
      %p121 = scmp.ne.s32.totalorder %s109, %s110
      %p122 = scmp.eq.s32.totalorder %s32, 1
      %p123 = por %p121, %p122
      %p125 = scmp.ne.s32.totalorder %s110, %s124
      %p126 = scmp.eq.s32.totalorder %s32, 0
      %p127 = por %p125, %p126
      %s129 = sadd.s32 %s128, 1
      %p132 = scmp.eq.s32.totalorder %s26, 1
      %p133 = scmp.ne.s32.totalorder %s128, %s130
      %p134 = scmp.eq.s32.totalorder %s26, 0
      %p135 = por %p133, %p134
      %p136 = scmp.ne.s32.totalorder %s128, %s130
      %p137 = scmp.eq.s32.totalorder %s31, 1
      %p138 = por %p136, %p137
      %p139 = scmp.ne.s32.totalorder %s130, %s131
      %p140 = scmp.eq.s32.totalorder %s31, 0
      %p141 = por %p139, %p140
      %p142 = scmp.ne.s32.totalorder %s130, %s131
      %p143 = scmp.eq.s32.totalorder %s32, 1
      %p144 = por %p142, %p143
      %p146 = scmp.ne.s32.totalorder %s131, %s145
      %p147 = scmp.eq.s32.totalorder %s32, 0
      %p148 = por %p146, %p147
      %s150 = sadd.s32 %s149, 1
      %p153 = scmp.eq.s32.totalorder %s26, 1
      %p154 = scmp.ne.s32.totalorder %s149, %s151
      %p155 = scmp.eq.s32.totalorder %s26, 0
      %p156 = por %p154, %p155
      %p157 = scmp.ne.s32.totalorder %s149, %s151
      %p158 = scmp.eq.s32.totalorder %s31, 1
      %p159 = por %p157, %p158
      %p160 = scmp.ne.s32.totalorder %s151, %s152
      %p161 = scmp.eq.s32.totalorder %s31, 0
      %p162 = por %p160, %p161
      %p163 = scmp.ne.s32.totalorder %s151, %s152
      %p164 = scmp.eq.s32.totalorder %s32, 1
      %p165 = por %p163, %p164
      %p167 = scmp.ne.s32.totalorder %s152, %s166
      %p168 = scmp.eq.s32.totalorder %s32, 0
      %p169 = por %p167, %p168
      %s171 = sadd.s32 %s170, 1
      %p174 = scmp.eq.s32.totalorder %s26, 1
      %p175 = scmp.ne.s32.totalorder %s170, %s172
      %p176 = scmp.eq.s32.totalorder %s26, 0
      %p177 = por %p175, %p176
      %p178 = scmp.ne.s32.totalorder %s170, %s172
      %p179 = scmp.eq.s32.totalorder %s31, 1
      %p180 = por %p178, %p179
      %p181 = scmp.ne.s32.totalorder %s172, %s173
      %p182 = scmp.eq.s32.totalorder %s31, 0
      %p183 = por %p181, %p182
      %p184 = scmp.ne.s32.totalorder %s172, %s173
      %p185 = scmp.eq.s32.totalorder %s32, 1
      %p186 = por %p184, %p185
      %p188 = scmp.ne.s32.totalorder %s173, %s187
      %p189 = scmp.eq.s32.totalorder %s32, 0
      %p190 = por %p188, %p189
      %s192 = sadd.s32 %s191, 1
      %p195 = scmp.eq.s32.totalorder %s26, 1
      %p196 = scmp.ne.s32.totalorder %s191, %s193
      %p197 = scmp.eq.s32.totalorder %s26, 0
      %p198 = por %p196, %p197
      %p199 = scmp.ne.s32.totalorder %s191, %s193
      %p200 = scmp.eq.s32.totalorder %s31, 1
      %p201 = por %p199, %p200
      %p202 = scmp.ne.s32.totalorder %s193, %s194
      %p203 = scmp.eq.s32.totalorder %s31, 0
      %p204 = por %p202, %p203
      %p205 = scmp.ne.s32.totalorder %s193, %s194
      %p206 = scmp.eq.s32.totalorder %s32, 1
      %p207 = por %p205, %p206
      %p209 = scmp.ne.s32.totalorder %s194, %s208
      %p210 = scmp.eq.s32.totalorder %s32, 0
      %p211 = por %p209, %p210
      %s213 = sadd.s32 %s212, 1
      %p216 = scmp.eq.s32.totalorder %s26, 1
      %p217 = scmp.ne.s32.totalorder %s212, %s214
      %p218 = scmp.eq.s32.totalorder %s26, 0
      %p219 = por %p217, %p218
      %p220 = scmp.ne.s32.totalorder %s212, %s214
      %p221 = scmp.eq.s32.totalorder %s31, 1
      %p222 = por %p220, %p221
      %p223 = scmp.ne.s32.totalorder %s214, %s215
      %p224 = scmp.eq.s32.totalorder %s31, 0
      %p225 = por %p223, %p224
      %p226 = scmp.ne.s32.totalorder %s214, %s215
      %p227 = scmp.eq.s32.totalorder %s32, 1
      %p228 = por %p226, %p227
      %p230 = scmp.ne.s32.totalorder %s215, %s229
      %p231 = scmp.eq.s32.totalorder %s32, 0
      %p232 = por %p230, %p231
      %s234 = sadd.s32 %s233, 1
      %p237 = scmp.eq.s32.totalorder %s26, 1
      %p238 = scmp.ne.s32.totalorder %s233, %s235
      %p239 = scmp.eq.s32.totalorder %s26, 0
      %p240 = por %p238, %p239
      %p241 = scmp.ne.s32.totalorder %s233, %s235
      %p242 = scmp.eq.s32.totalorder %s31, 1
      %p243 = por %p241, %p242
      %p244 = scmp.ne.s32.totalorder %s235, %s236
      %p245 = scmp.eq.s32.totalorder %s31, 0
      %p246 = por %p244, %p245
      %p247 = scmp.ne.s32.totalorder %s235, %s236
      %p248 = scmp.eq.s32.totalorder %s32, 1
      %p249 = por %p247, %p248
      %p251 = scmp.ne.s32.totalorder %s236, %s250
      %p252 = scmp.eq.s32.totalorder %s32, 0
      %p253 = por %p251, %p252
      %s255 = sadd.s32 %s254, 1
      %p258 = scmp.eq.s32.totalorder %s26, 1
      %p259 = scmp.ne.s32.totalorder %s254, %s256
      %p260 = scmp.eq.s32.totalorder %s26, 0
      %p261 = por %p259, %p260
      %p262 = scmp.ne.s32.totalorder %s254, %s256
      %p263 = scmp.eq.s32.totalorder %s31, 1
      %p264 = por %p262, %p263
      %p265 = scmp.ne.s32.totalorder %s256, %s257
      %p266 = scmp.eq.s32.totalorder %s31, 0
      %p267 = por %p265, %p266
      %p268 = scmp.ne.s32.totalorder %s256, %s257
      %p269 = scmp.eq.s32.totalorder %s32, 1
      %p270 = por %p268, %p269
      %p272 = scmp.ne.s32.totalorder %s257, %s271
      %p273 = scmp.eq.s32.totalorder %s32, 0
      %p274 = por %p272, %p273
      %s276 = sadd.s32 %s275, 1
      %p279 = scmp.eq.s32.totalorder %s26, 1
      %p280 = scmp.ne.s32.totalorder %s275, %s277
      %p281 = scmp.eq.s32.totalorder %s26, 0
      %p282 = por %p280, %p281
      %p283 = scmp.ne.s32.totalorder %s275, %s277
      %p284 = scmp.eq.s32.totalorder %s31, 1
      %p285 = por %p283, %p284
      %p286 = scmp.ne.s32.totalorder %s277, %s278
      %p287 = scmp.eq.s32.totalorder %s31, 0
      %p288 = por %p286, %p287
      %p289 = scmp.ne.s32.totalorder %s277, %s278
      %p290 = scmp.eq.s32.totalorder %s32, 1
      %p291 = por %p289, %p290
      %p293 = scmp.ne.s32.totalorder %s278, %s292
      %p294 = scmp.eq.s32.totalorder %s32, 0
      %p295 = por %p293, %p294
      %s296 = ssub.s32 %s26, %s33
      %p297 = scmp.eq.s32.totalorder %s296, 0
      %s299 = sadd.s32 %s298, 1
      %s300 = scalar_select %p297, %s298, %s299
      %p303 = pneg %p297
      %p304 = scmp.eq.s32.totalorder %s26, 1
      %p305 = por %p303, %p304
      %p306 = scmp.ne.s32.totalorder %s298, %s301
      %p307 = scmp.eq.s32.totalorder %s26, 0
      %p308 = por %p306, %p307
      %p309 = scmp.ne.s32.totalorder %s298, %s301
      %p310 = scmp.eq.s32.totalorder %s31, 1
      %p311 = por %p309, %p310
      %p312 = scmp.ne.s32.totalorder %s301, %s302
      %p313 = scmp.eq.s32.totalorder %s31, 0
      %p314 = por %p312, %p313
      %p315 = scmp.ne.s32.totalorder %s301, %s302
      %p316 = scmp.eq.s32.totalorder %s32, 1
      %p317 = por %p315, %p316
      %p319 = scmp.ne.s32.totalorder %s302, %s318
      %p320 = scmp.eq.s32.totalorder %s32, 0
      %p321 = por %p319, %p320
      %p322 = scmp.le.s32.totalorder 1, %s26
      %p323 = scmp.lt.s32.totalorder %s26, 3
      %p324 = pnand %p322, %p323
      %p325 = pneg %p324
      // Predicated region
      $region9: #{tpu_custom_call.1} parent=5 // pred_check
        _
      $region10: #{tpu_custom_call.1} parent=5 // pred_check_branch
        %327 = sbr.rel (%p324) target = $region12
      $region11: #{tpu_custom_call.1} parent=5 // pred_region
        %s328 = ssub.s32 %s26, 1
        // Predicated region
        $region13: #{tpu_custom_call.1} parent=11 // pred_check
          %p329 = pneg %p99
        $region14: #{tpu_custom_call.1} parent=11 // pred_check_branch
          %331 = sbr.rel (%p329) target = $region16
        $region15: #{tpu_custom_call.1} parent=11 // pred_region
          _
        $region16: #{tpu_custom_call.1} parent=11 // pred_fallthru
          _
        // Predicated region
        $region17: #{tpu_custom_call.1} parent=11 // pred_check
          %p332 = pneg %p120
        $region18: #{tpu_custom_call.1} parent=11 // pred_check_branch
          %334 = sbr.rel (%p332) target = $region20
        $region19: #{tpu_custom_call.1} parent=11 // pred_region
          %s336 = ssub.s32 1024, 1024
          %337 = vsyncadd [#allocation9], %s336
          %s338 = sshll.u32 [#allocation8], 4
          %s339 = int_to_ptr.vmem [resolvable:$true] %s338
          %344 = dma.hbm_to_vmem [thread:$0]  %s3, 1024, %s339, [#allocation9], 128, 128, 8
        $region20: #{tpu_custom_call.1} parent=11 // pred_fallthru
          _
        // Predicated region
        $region21: #{tpu_custom_call.1} parent=11 // pred_check
          %p345 = pneg %p141
        $region22: #{tpu_custom_call.1} parent=11 // pred_check_branch
          %347 = sbr.rel (%p345) target = $region24
        $region23: #{tpu_custom_call.1} parent=11 // pred_region
          _
        $region24: #{tpu_custom_call.1} parent=11 // pred_fallthru
          _
        // Predicated region
        $region25: #{tpu_custom_call.1} parent=11 // pred_check
          %p348 = pneg %p162
        $region26: #{tpu_custom_call.1} parent=11 // pred_check_branch
          %350 = sbr.rel (%p348) target = $region28
        $region27: #{tpu_custom_call.1} parent=11 // pred_region
          %s352 = ssub.s32 3072, 3072
          %353 = vsyncadd [#allocation9], %s352
          %s354 = sshll.u32 [#allocation10], 4
          %s355 = int_to_ptr.vmem [resolvable:$true] %s354
          %360 = dma.hbm_to_vmem [thread:$0]  %s5, 3072, %s355, [#allocation9], 128, 128, 8
        $region28: #{tpu_custom_call.1} parent=11 // pred_fallthru
          _
        // Predicated region
        $region29: #{tpu_custom_call.1} parent=11 // pred_check
          %p361 = pneg %p183
        $region30: #{tpu_custom_call.1} parent=11 // pred_check_branch
          %363 = sbr.rel (%p361) target = $region32
        $region31: #{tpu_custom_call.1} parent=11 // pred_region
          %s365 = ssub.s32 3072, 3072
          %366 = vsyncadd [#allocation12], %s365
          %s367 = sshll.u32 [#allocation11], 4
          %s368 = int_to_ptr.vmem [resolvable:$true] %s367
          %373 = dma.hbm_to_vmem [thread:$0]  %s6, 3072, %s368, [#allocation12], 128, 128, 8
        $region32: #{tpu_custom_call.1} parent=11 // pred_fallthru
          _
        // Predicated region
        $region33: #{tpu_custom_call.1} parent=11 // pred_check
          %p374 = pneg %p204
        $region34: #{tpu_custom_call.1} parent=11 // pred_check_branch
          %376 = sbr.rel (%p374) target = $region36
        $region35: #{tpu_custom_call.1} parent=11 // pred_region
          _
        $region36: #{tpu_custom_call.1} parent=11 // pred_fallthru
          _
        // Predicated region
        $region37: #{tpu_custom_call.1} parent=11 // pred_check
          %p377 = pneg %p225
        $region38: #{tpu_custom_call.1} parent=11 // pred_check_branch
          %379 = sbr.rel (%p377) target = $region40
        $region39: #{tpu_custom_call.1} parent=11 // pred_region
          _
        $region40: #{tpu_custom_call.1} parent=11 // pred_fallthru
          _
        // Predicated region
        $region41: #{tpu_custom_call.1} parent=11 // pred_check
          %p380 = pneg %p246
        $region42: #{tpu_custom_call.1} parent=11 // pred_check_branch
          %382 = sbr.rel (%p380) target = $region44
        $region43: #{tpu_custom_call.1} parent=11 // pred_region
          %s384 = ssub.s32 3072, 3072
          %385 = vsyncadd [#allocation12], %s384
          %s386 = sshll.u32 [#allocation13], 4
          %s387 = int_to_ptr.vmem [resolvable:$true] %s386
          %392 = dma.hbm_to_vmem [thread:$0]  %s9, 3072, %s387, [#allocation12], 128, 128, 8
        $region44: #{tpu_custom_call.1} parent=11 // pred_fallthru
          _
        // Predicated region
        $region45: #{tpu_custom_call.1} parent=11 // pred_check
          %p393 = pneg %p267
        $region46: #{tpu_custom_call.1} parent=11 // pred_check_branch
          %395 = sbr.rel (%p393) target = $region48
        $region47: #{tpu_custom_call.1} parent=11 // pred_region
          _
        $region48: #{tpu_custom_call.1} parent=11 // pred_fallthru
          _
        // Predicated region
        $region49: #{tpu_custom_call.1} parent=11 // pred_check
          %p396 = pneg %p288
        $region50: #{tpu_custom_call.1} parent=11 // pred_check_branch
          %398 = sbr.rel (%p396) target = $region52
        $region51: #{tpu_custom_call.1} parent=11 // pred_region
          _
        $region52: #{tpu_custom_call.1} parent=11 // pred_fallthru
          _
      $region12: #{tpu_custom_call.1} parent=5 // pred_fallthru
        _
      %p399 = scmp.lt.s32.totalorder %s26, 2
      // Predicated region
      $region53: #{tpu_custom_call.1} parent=5 // pred_check
        %p400 = pneg %p399
      $region54: #{tpu_custom_call.1} parent=5 // pred_check_branch
        %402 = sbr.rel (%p400) target = $region56
      $region55: #{tpu_custom_call.1} parent=5 // pred_region
        // Predicated region
        $region57: #{tpu_custom_call.1} parent=55 // pred_check
          %p403 = pneg %p46
        $region58: #{tpu_custom_call.1} parent=55 // pred_check_branch
          %405 = sbr.rel (%p403) target = $region60
        $region59: #{tpu_custom_call.1} parent=55 // pred_region
          %s406 = sand.u32 %s36, 1
          %s407 = scalar_lea.sflag [#allocation6], %s406
          %s408 = sand.u32 %s36, 1
          %s409 = smul.addr %s408, 16
          %s410 = scalar_lea.vmem [#allocation5], %s409
          %s412 = ssub.s32 256, 256
          %413 = vsyncadd %s407, %s412
          %s414 = smul.addr %s26, 2
          %s415 = smul.addr %s414, 128
          %s416 = scalar_lea.hbm %s0, %s415
          %s417 = sshll.u32 %s410, 4
          %s418 = int_to_ptr.vmem [resolvable:$true] %s417
          %423 = dma.hbm_to_vmem [thread:$0]  %s416, 256, %s418, %s407, 128, 128, 8
        $region60: #{tpu_custom_call.1} parent=55 // pred_fallthru
          _
        // Predicated region
        $region61: #{tpu_custom_call.1} parent=55 // pred_check
          %p424 = pneg %p72
        $region62: #{tpu_custom_call.1} parent=55 // pred_check_branch
          %426 = sbr.rel (%p424) target = $region64
        $region63: #{tpu_custom_call.1} parent=55 // pred_region
          %p427 = scmp.lt.s32.totalorder %s26, 1
          %s428 = scalar_select %p427, %s26, 1
          %s429 = smul.addr %s428, 8
          %s430 = scalar_lea.vmem %s1, %s429
        $region64: #{tpu_custom_call.1} parent=55 // pred_fallthru
          _
      $region56: #{tpu_custom_call.1} parent=5 // pred_fallthru
        _
      %p431 = scmp.le.s32.totalorder 1, %s26
      %p432 = scmp.lt.s32.totalorder %s26, 3
      %p433 = pnand %p431, %p432
      %p434 = pneg %p433
      // Predicated region
      $region65: #{tpu_custom_call.1} parent=5 // pred_check
        _
      $region66: #{tpu_custom_call.1} parent=5 // pred_check_branch
        %436 = sbr.rel (%p433) target = $region68
      $region67: #{tpu_custom_call.1} parent=5 // pred_region
        %s437 = ssub.s32 %s26, 1
        %s438 = sand.u32 %s39, 1
        %s439 = scalar_lea.sflag [#allocation6], %s438
        %s440 = sand.u32 %s39, 1
        %s441 = smul.addr %s440, 16
        %s442 = scalar_lea.vmem [#allocation5], %s441
        // Predicated region
        $region69: #{tpu_custom_call.1} parent=67 // pred_check
          %p443 = pneg %p52
        $region70: #{tpu_custom_call.1} parent=67 // pred_check_branch
          %445 = sbr.rel (%p443) target = $region72
        $region71: #{tpu_custom_call.1} parent=67 // pred_region
          %446 = dma.done %s439, 256
        $region72: #{tpu_custom_call.1} parent=67 // pred_fallthru
          _
        // Predicated region
        $region73: #{tpu_custom_call.1} parent=67 // pred_check
          %p447 = pneg %p120
        $region74: #{tpu_custom_call.1} parent=67 // pred_check_branch
          %449 = sbr.rel (%p447) target = $region76
        $region75: #{tpu_custom_call.1} parent=67 // pred_region
          %450 = dma.done [#allocation9], 1024
        $region76: #{tpu_custom_call.1} parent=67 // pred_fallthru
          _
        // Predicated region
        $region77: #{tpu_custom_call.1} parent=67 // pred_check
          %p451 = pneg %p162
        $region78: #{tpu_custom_call.1} parent=67 // pred_check_branch
          %453 = sbr.rel (%p451) target = $region80
        $region79: #{tpu_custom_call.1} parent=67 // pred_region
          %454 = dma.done [#allocation9], 3072
        $region80: #{tpu_custom_call.1} parent=67 // pred_fallthru
          _
        // Predicated region
        $region81: #{tpu_custom_call.1} parent=67 // pred_check
          %p455 = pneg %p183
        $region82: #{tpu_custom_call.1} parent=67 // pred_check_branch
          %457 = sbr.rel (%p455) target = $region84
        $region83: #{tpu_custom_call.1} parent=67 // pred_region
          %458 = dma.done [#allocation12], 3072
        $region84: #{tpu_custom_call.1} parent=67 // pred_fallthru
          _
        // Predicated region
        $region85: #{tpu_custom_call.1} parent=67 // pred_check
          %p459 = pneg %p246
        $region86: #{tpu_custom_call.1} parent=67 // pred_check_branch
          %461 = sbr.rel (%p459) target = $region88
        $region87: #{tpu_custom_call.1} parent=67 // pred_region
          %462 = dma.done [#allocation12], 3072
        $region88: #{tpu_custom_call.1} parent=67 // pred_fallthru
          _
        %s463 = sand.u32 %s39, 1
        %s464 = scalar_lea.sflag [#allocation6], %s463
        %s465 = sand.u32 %s39, 1
        %s466 = smul.addr %s465, 16
        %s467 = scalar_lea.vmem [#allocation5], %s466
        %p468 = pneg %p52
        %p469 = pneg %p49
        %p470 = scmp.lt.s32.totalorder %s31, 1
        %s471 = scalar_select %p470, %s31, 1
        %s472 = smul.addr %s471, 8
        %s473 = scalar_lea.vmem %s1, %s472
        %p474 = pneg %p78
        %p475 = pneg %p75
        %p476 = pneg %p99
        %p477 = pneg %p96
        %p478 = pneg %p120
        %p479 = pneg %p117
        %p480 = pneg %p141
        %p481 = pneg %p138
        %p482 = pneg %p162
        %p483 = pneg %p159
        %p484 = pneg %p183
        %p485 = pneg %p180
        %p486 = pneg %p204
        %p487 = pneg %p201
        %p488 = pneg %p225
        %p489 = pneg %p222
        %p490 = pneg %p246
        %p491 = pneg %p243
        %p492 = pneg %p267
        %p493 = pneg %p264
        %p494 = pneg %p288
        %p495 = pneg %p285
        %p496 = pneg %p314
        %p497 = pneg %p311
        %s498 = sand.u32 %s301, 1
        %s499 = scalar_lea.sflag [#allocation7], %s498
        %s500 = sand.u32 %s301, 1
        %s501 = smul.addr %s500, 16
        %s502 = scalar_lea.vmem [#allocation14], %s501
        %p503 = scmp.lt.s32.totalorder %s31, 1
        %s504 = scalar_select %p503, %s31, 1
        %s505 = smul.addr %s504, 8
        %s506 = scalar_lea.vmem %s1, %s505
        %v507 = vld [vmem:[%s2] sm:$0xff]
        %v508 = vld [vmem:[%s2 + $0x8] sm:$0xff]
        %v509 = vld [vmem:[%s506] sm:$0xff]
        %vm510 = vcmask 64512
        %v512 = vsel %vm510, %v507, 0
        %v515 = vsel %vm510, %v508, 0
        %517 = vmatprep.subr.mxu0 0.0
        %518 = vmatpush1.msra.mxu0 0.0
        %519 = vmatprep.subr.mxu0 0.0
        %520 = vmatpush1.msra.mxu0 0.0
        %521 = vmatprep.subr.mxu0 0.0
        %522 = vmatpush1.msra.mxu0 0.0
        %523 = vmatprep.subr.mxu0 0.0
        %524 = vmatpush1.msra.mxu0 0.0
        %525 = vmatprep.subr.mxu0 0.0
        %526 = vmatpush1.msra.mxu0 0.0
        %527 = vmatprep.subr.mxu0 0.0
        %528 = vmatpush1.msra.mxu0 0.0
        %529 = vmatprep.subr.mxu0 0.0
        %530 = vmatpush1.msra.mxu0 0.0
        %531 = vmatprep.subr.mxu0 0.0
        %532 = vmatpush1.msra.mxu0 0.0
        %533 = vmatprep.subr.mxu0 0.0
        %534 = vmatpush1.msra.mxu0 0.0
        %535 = vmatprep.subr.mxu0 0.0
        %536 = vmatpush1.msra.mxu0 0.0
        %537 = vmatprep.subr.mxu0 0.0
        %538 = vmatpush1.msra.mxu0 0.0
        %539 = vmatprep.subr.mxu0 0.0
        %540 = vmatpush1.msra.mxu0 0.0
        %541 = vmatprep.subr.mxu0 0.0
        %542 = vmatpush1.msra.mxu0 0.0
        %543 = vmatprep.subr.mxu0 0.0
        %544 = vmatpush1.msra.mxu0 0.0
        %545 = vmatprep.subr.mxu0 0.0
        %546 = vmatpush1.msra.mxu0 0.0
        %547 = vmatprep.subr.mxu0 0.0
        %548 = vmatpush1.msra.mxu0 %v509
        %549 = vmatprep.subr.mxu0 0.0
        %550 = vmatpush2.msra.mxu0 0.0
        %551 = vmatprep.subr.mxu0 0.0
        %552 = vmatpush2.msra.mxu0 0.0
        %553 = vmatprep.subr.mxu0 0.0
        %554 = vmatpush2.msra.mxu0 0.0
        %555 = vmatprep.subr.mxu0 0.0
        %556 = vmatpush2.msra.mxu0 0.0
        %557 = vmatprep.subr.mxu0 0.0
        %558 = vmatpush2.msra.mxu0 0.0
        %559 = vmatprep.subr.mxu0 0.0
        %560 = vmatpush2.msra.mxu0 0.0
        %561 = vmatprep.subr.mxu0 0.0
        %562 = vmatpush2.msra.mxu0 0.0
        %563 = vmatprep.subr.mxu0 0.0
        %564 = vmatpush2.msra.mxu0 0.0
        %565 = vmatprep.subr.mxu0 0.0
        %566 = vmatpush2.msra.mxu0 0.0
        %567 = vmatprep.subr.mxu0 0.0
        %568 = vmatpush2.msra.mxu0 0.0
        %569 = vmatprep.subr.mxu0 0.0
        %570 = vmatpush2.msra.mxu0 0.0
        %571 = vmatprep.subr.mxu0 0.0
        %572 = vmatpush2.msra.mxu0 0.0
        %573 = vmatprep.subr.mxu0 0.0
        %574 = vmatpush2.msra.mxu0 0.0
        %575 = vmatprep.subr.mxu0 0.0
        %576 = vmatpush2.msra.mxu0 0.0
        %577 = vmatprep.subr.mxu0 0.0
        %578 = vmatpush2.msra.mxu0 0.0
        %579 = vmatprep.subr.mxu0 0.0
        %580 = vmatpush2.msra.mxu0 0.0
        %581 = vmatprep.mubr.f32.mxu0 0.0
        %582 = vmatmul.mubr.f32.gmra.mxu0 %v512
        %v583 = vpop.f32.mrf.mxu0
        %v584 = vadd.f32 0.0, %v583
        %v585 = vpop.f32.mrf.mxu0
        %586 = vmatprep.mubr.f32.mxu0 0.0
        %587 = vmatmul.mubr.f32.gmra.mxu0 %v515
        %v588 = vpop.f32.mrf.mxu0
        %v589 = vadd.f32 0.0, %v588
        %v590 = vpop.f32.mrf.mxu0
        %591 = vdwg.mxu0
        %v592 = vld [vmem:[#allocation8] sm:$0xff]
        %v593 = vld [vmem:[#allocation8 + $0x8] sm:$0xff]
        %v594 = vld [vmem:[#allocation8 + $0x10] sm:$0xff]
        %v595 = vld [vmem:[#allocation8 + $0x18] sm:$0xff]
        %v596 = vld [vmem:[#allocation8 + $0x20] sm:$0xff]
        %v597 = vld [vmem:[#allocation8 + $0x28] sm:$0xff]
        %v598 = vld [vmem:[#allocation8 + $0x30] sm:$0xff]
        %v599 = vld [vmem:[#allocation8 + $0x38] sm:$0xff]
        %v600 = vld [vmem:[%s4] sm:$0x1]
        %v602 = vlaneseq
        %v603 = vshrl.u32 %v602, 7
        %v604 = vsub.s32 0, %v603
        %v605 = vrot.slane %v600, %v604
        %vm607 = vcmask 523264
        %v609 = vsel %vm607, %v584, 0
        %v612 = vsel %vm607, %v589, 0
        %614 = vmatprep.subr.mxu0 0.0
        %615 = vmatpush1.msra.mxu0 0.0
        %616 = vmatprep.subr.mxu0 0.0
        %617 = vmatpush1.msra.mxu0 0.0
        %618 = vmatprep.subr.mxu0 0.0
        %619 = vmatpush1.msra.mxu0 0.0
        %620 = vmatprep.subr.mxu0 0.0
        %621 = vmatpush1.msra.mxu0 0.0
        %622 = vmatprep.subr.mxu0 0.0
        %623 = vmatpush1.msra.mxu0 0.0
        %624 = vmatprep.subr.mxu0 0.0
        %625 = vmatpush1.msra.mxu0 0.0
        %626 = vmatprep.subr.mxu0 0.0
        %627 = vmatpush1.msra.mxu0 0.0
        %628 = vmatprep.subr.mxu0 0.0
        %629 = vmatpush1.msra.mxu0 0.0
        %630 = vmatprep.subr.mxu0 0.0
        %631 = vmatpush1.msra.mxu0 %v599
        %632 = vmatprep.subr.mxu0 0.0
        %633 = vmatpush1.msra.mxu0 %v598
        %634 = vmatprep.subr.mxu0 0.0
        %635 = vmatpush1.msra.mxu0 %v597
        %636 = vmatprep.subr.mxu0 0.0
        %637 = vmatpush1.msra.mxu0 %v596
        %638 = vmatprep.subr.mxu0 0.0
        %639 = vmatpush1.msra.mxu0 %v595
        %640 = vmatprep.subr.mxu0 0.0
        %641 = vmatpush1.msra.mxu0 %v594
        %642 = vmatprep.subr.mxu0 0.0
        %643 = vmatpush1.msra.mxu0 %v593
        %644 = vmatprep.subr.mxu0 0.0
        %645 = vmatpush1.msra.mxu0 %v592
        %646 = vmatprep.subr.mxu0 0.0
        %647 = vmatpush2.msra.mxu0 0.0
        %648 = vmatprep.subr.mxu0 0.0
        %649 = vmatpush2.msra.mxu0 0.0
        %650 = vmatprep.subr.mxu0 0.0
        %651 = vmatpush2.msra.mxu0 0.0
        %652 = vmatprep.subr.mxu0 0.0
        %653 = vmatpush2.msra.mxu0 0.0
        %654 = vmatprep.subr.mxu0 0.0
        %655 = vmatpush2.msra.mxu0 0.0
        %656 = vmatprep.subr.mxu0 0.0
        %657 = vmatpush2.msra.mxu0 0.0
        %658 = vmatprep.subr.mxu0 0.0
        %659 = vmatpush2.msra.mxu0 0.0
        %660 = vmatprep.subr.mxu0 0.0
        %661 = vmatpush2.msra.mxu0 0.0
        %662 = vmatprep.subr.mxu0 0.0
        %663 = vmatpush2.msra.mxu0 0.0
        %664 = vmatprep.subr.mxu0 0.0
        %665 = vmatpush2.msra.mxu0 0.0
        %666 = vmatprep.subr.mxu0 0.0
        %667 = vmatpush2.msra.mxu0 0.0
        %668 = vmatprep.subr.mxu0 0.0
        %669 = vmatpush2.msra.mxu0 0.0
        %670 = vmatprep.subr.mxu0 0.0
        %671 = vmatpush2.msra.mxu0 0.0
        %672 = vmatprep.subr.mxu0 0.0
        %673 = vmatpush2.msra.mxu0 0.0
        %674 = vmatprep.subr.mxu0 0.0
        %675 = vmatpush2.msra.mxu0 0.0
        %676 = vmatprep.subr.mxu0 0.0
        %677 = vmatpush2.msra.mxu0 0.0
        %678 = vmatprep.mubr.f32.mxu0 0.0
        %679 = vmatmul.mubr.f32.gmra.mxu0 %v609
        %v680 = vpop.f32.mrf.mxu0
        %v681 = vadd.f32 %v605, %v680
        %v682 = vpop.f32.mrf.mxu0
        %683 = vmatprep.mubr.f32.mxu0 0.0
        %684 = vmatmul.mubr.f32.gmra.mxu0 %v612
        %v685 = vpop.f32.mrf.mxu0
        %v686 = vadd.f32 %v605, %v685
        %v687 = vpop.f32.mrf.mxu0
        %688 = vdwg.mxu0
        %vm689 = vcmask 516096
        %690 = vst.msk [vmem:[#allocation2] sm:$0x1] %vm689, 0.0
        %691 = vst.msk [vmem:[#allocation2 + $0x11] sm:$0x1] %vm689, 0.0
        %692 = vst.msk [vmem:[#allocation3] sm:$0x1] %vm689, 0.0
        %693 = vst.msk [vmem:[#allocation3 + $0x11] sm:$0x1] %vm689, 0.0
        %694 = vst.msk [vmem:[#allocation4] sm:$0x1] %vm689, 0.0
        %695 = vst.msk [vmem:[#allocation4 + $0x11] sm:$0x1] %vm689, 0.0
        %v696 = vld [vmem:[%s442] sm:$0xff]
        %v697 = vld [vmem:[%s442 + $0x8] sm:$0xff]
        %698 = vst.msk [vmem:[#allocation2 + $0x1] sm:$0xff] %vm607, %v696
        %699 = vst.msk [vmem:[#allocation2 + $0x9] sm:$0xff] %vm607, %v697
        %700 = vst.msk [vmem:[#allocation3 + $0x1] sm:$0xff] %vm607, %v681
        %701 = vst.msk [vmem:[#allocation3 + $0x9] sm:$0xff] %vm607, %v686
        %v702 = vld [vmem:[#allocation2] sm:$0xff]
        %v703 = vld [vmem:[#allocation2 + $0x8] sm:$0xff]
        %v704 = vld [vmem:[#allocation10] sm:$0xff]
        %v705 = vld [vmem:[#allocation10 + $0x8] sm:$0xff]
        %v706 = vld [vmem:[#allocation10 + $0x10] sm:$0xff]
        %v707 = vld [vmem:[#allocation10 + $0x18] sm:$0xff]
        %v708 = vld [vmem:[#allocation10 + $0x20] sm:$0xff]
        %v709 = vld [vmem:[#allocation10 + $0x28] sm:$0xff]
        %v710 = vld [vmem:[#allocation10 + $0x30] sm:$0xff]
        %v711 = vld [vmem:[#allocation10 + $0x38] sm:$0xff]
        %v712 = vld [vmem:[#allocation3] sm:$0xff]
        %v713 = vld [vmem:[#allocation3 + $0x8] sm:$0xff]
        %v714 = vld [vmem:[#allocation11] sm:$0xff]
        %v715 = vld [vmem:[#allocation11 + $0x8] sm:$0xff]
        %v716 = vld [vmem:[#allocation11 + $0x10] sm:$0xff]
        %v717 = vld [vmem:[#allocation11 + $0x18] sm:$0xff]
        %v718 = vld [vmem:[#allocation11 + $0x20] sm:$0xff]
        %v719 = vld [vmem:[#allocation11 + $0x28] sm:$0xff]
        %v720 = vld [vmem:[#allocation11 + $0x30] sm:$0xff]
        %v721 = vld [vmem:[#allocation11 + $0x38] sm:$0xff]
        %v723 = vsel %vm607, %v712, 0
        %v726 = vsel %vm607, %v713, 0
        %728 = vmatprep.subr.mxu0 0.0
        %729 = vmatpush1.msra.mxu0 0.0
        %730 = vmatprep.subr.mxu0 0.0
        %731 = vmatpush1.msra.mxu0 0.0
        %732 = vmatprep.subr.mxu0 0.0
        %733 = vmatpush1.msra.mxu0 0.0
        %734 = vmatprep.subr.mxu0 0.0
        %735 = vmatpush1.msra.mxu0 0.0
        %736 = vmatprep.subr.mxu0 0.0
        %737 = vmatpush1.msra.mxu0 0.0
        %738 = vmatprep.subr.mxu0 0.0
        %739 = vmatpush1.msra.mxu0 0.0
        %740 = vmatprep.subr.mxu0 0.0
        %741 = vmatpush1.msra.mxu0 0.0
        %742 = vmatprep.subr.mxu0 0.0
        %743 = vmatpush1.msra.mxu0 0.0
        %744 = vmatprep.subr.mxu0 0.0
        %745 = vmatpush1.msra.mxu0 %v721
        %746 = vmatprep.subr.mxu0 0.0
        %747 = vmatpush1.msra.mxu0 %v720
        %748 = vmatprep.subr.mxu0 0.0
        %749 = vmatpush1.msra.mxu0 %v719
        %750 = vmatprep.subr.mxu0 0.0
        %751 = vmatpush1.msra.mxu0 %v718
        %752 = vmatprep.subr.mxu0 0.0
        %753 = vmatpush1.msra.mxu0 %v717
        %754 = vmatprep.subr.mxu0 0.0
        %755 = vmatpush1.msra.mxu0 %v716
        %756 = vmatprep.subr.mxu0 0.0
        %757 = vmatpush1.msra.mxu0 %v715
        %758 = vmatprep.subr.mxu0 0.0
        %759 = vmatpush1.msra.mxu0 %v714
        %760 = vmatprep.subr.mxu0 0.0
        %761 = vmatpush2.msra.mxu0 0.0
        %762 = vmatprep.subr.mxu0 0.0
        %763 = vmatpush2.msra.mxu0 0.0
        %764 = vmatprep.subr.mxu0 0.0
        %765 = vmatpush2.msra.mxu0 0.0
        %766 = vmatprep.subr.mxu0 0.0
        %767 = vmatpush2.msra.mxu0 0.0
        %768 = vmatprep.subr.mxu0 0.0
        %769 = vmatpush2.msra.mxu0 0.0
        %770 = vmatprep.subr.mxu0 0.0
        %771 = vmatpush2.msra.mxu0 0.0
        %772 = vmatprep.subr.mxu0 0.0
        %773 = vmatpush2.msra.mxu0 0.0
        %774 = vmatprep.subr.mxu0 0.0
        %775 = vmatpush2.msra.mxu0 0.0
        %776 = vmatprep.subr.mxu0 0.0
        %777 = vmatpush2.msra.mxu0 0.0
        %778 = vmatprep.subr.mxu0 0.0
        %779 = vmatpush2.msra.mxu0 0.0
        %780 = vmatprep.subr.mxu0 0.0
        %781 = vmatpush2.msra.mxu0 0.0
        %782 = vmatprep.subr.mxu0 0.0
        %783 = vmatpush2.msra.mxu0 0.0
        %784 = vmatprep.subr.mxu0 0.0
        %785 = vmatpush2.msra.mxu0 0.0
        %786 = vmatprep.subr.mxu0 0.0
        %787 = vmatpush2.msra.mxu0 0.0
        %788 = vmatprep.subr.mxu0 0.0
        %789 = vmatpush2.msra.mxu0 0.0
        %790 = vmatprep.subr.mxu0 0.0
        %791 = vmatpush2.msra.mxu0 0.0
        %792 = vmatprep.mubr.f32.mxu0 0.0
        %793 = vmatmul.mubr.f32.gmra.mxu0 %v723
        %v794 = vpop.f32.mrf.mxu0
        %v795 = vadd.f32 0.0, %v794
        %v796 = vpop.f32.mrf.mxu0
        %797 = vmatprep.mubr.f32.mxu0 0.0
        %798 = vmatmul.mubr.f32.gmra.mxu0 %v726
        %v799 = vpop.f32.mrf.mxu0
        %v800 = vadd.f32 0.0, %v799
        %v801 = vpop.f32.mrf.mxu0
        %802 = vdwg.mxu0
        %v804 = vsel %vm607, %v702, 0
        %v807 = vsel %vm607, %v703, 0
        %809 = vmatprep.subr.mxu0 0.0
        %810 = vmatpush1.msra.mxu0 0.0
        %811 = vmatprep.subr.mxu0 0.0
        %812 = vmatpush1.msra.mxu0 0.0
        %813 = vmatprep.subr.mxu0 0.0
        %814 = vmatpush1.msra.mxu0 0.0
        %815 = vmatprep.subr.mxu0 0.0
        %816 = vmatpush1.msra.mxu0 0.0
        %817 = vmatprep.subr.mxu0 0.0
        %818 = vmatpush1.msra.mxu0 0.0
        %819 = vmatprep.subr.mxu0 0.0
        %820 = vmatpush1.msra.mxu0 0.0
        %821 = vmatprep.subr.mxu0 0.0
        %822 = vmatpush1.msra.mxu0 0.0
        %823 = vmatprep.subr.mxu0 0.0
        %824 = vmatpush1.msra.mxu0 0.0
        %825 = vmatprep.subr.mxu0 0.0
        %826 = vmatpush1.msra.mxu0 %v711
        %827 = vmatprep.subr.mxu0 0.0
        %828 = vmatpush1.msra.mxu0 %v710
        %829 = vmatprep.subr.mxu0 0.0
        %830 = vmatpush1.msra.mxu0 %v709
        %831 = vmatprep.subr.mxu0 0.0
        %832 = vmatpush1.msra.mxu0 %v708
        %833 = vmatprep.subr.mxu0 0.0
        %834 = vmatpush1.msra.mxu0 %v707
        %835 = vmatprep.subr.mxu0 0.0
        %836 = vmatpush1.msra.mxu0 %v706
        %837 = vmatprep.subr.mxu0 0.0
        %838 = vmatpush1.msra.mxu0 %v705
        %839 = vmatprep.subr.mxu0 0.0
        %840 = vmatpush1.msra.mxu0 %v704
        %841 = vmatprep.subr.mxu0 0.0
        %842 = vmatpush2.msra.mxu0 0.0
        %843 = vmatprep.subr.mxu0 0.0
        %844 = vmatpush2.msra.mxu0 0.0
        %845 = vmatprep.subr.mxu0 0.0
        %846 = vmatpush2.msra.mxu0 0.0
        %847 = vmatprep.subr.mxu0 0.0
        %848 = vmatpush2.msra.mxu0 0.0
        %849 = vmatprep.subr.mxu0 0.0
        %850 = vmatpush2.msra.mxu0 0.0
        %851 = vmatprep.subr.mxu0 0.0
        %852 = vmatpush2.msra.mxu0 0.0
        %853 = vmatprep.subr.mxu0 0.0
        %854 = vmatpush2.msra.mxu0 0.0
        %855 = vmatprep.subr.mxu0 0.0
        %856 = vmatpush2.msra.mxu0 0.0
        %857 = vmatprep.subr.mxu0 0.0
        %858 = vmatpush2.msra.mxu0 0.0
        %859 = vmatprep.subr.mxu0 0.0
        %860 = vmatpush2.msra.mxu0 0.0
        %861 = vmatprep.subr.mxu0 0.0
        %862 = vmatpush2.msra.mxu0 0.0
        %863 = vmatprep.subr.mxu0 0.0
        %864 = vmatpush2.msra.mxu0 0.0
        %865 = vmatprep.subr.mxu0 0.0
        %866 = vmatpush2.msra.mxu0 0.0
        %867 = vmatprep.subr.mxu0 0.0
        %868 = vmatpush2.msra.mxu0 0.0
        %869 = vmatprep.subr.mxu0 0.0
        %870 = vmatpush2.msra.mxu0 0.0
        %871 = vmatprep.subr.mxu0 0.0
        %872 = vmatpush2.msra.mxu0 0.0
        %873 = vmatprep.mubr.f32.mxu0 0.0
        %874 = vmatmul.mubr.f32.gmra.mxu0 %v804
        %v875 = vpop.f32.mrf.mxu0
        %v876 = vadd.f32 %v795, %v875
        %v877 = vpop.f32.mrf.mxu0
        %878 = vmatprep.mubr.f32.mxu0 0.0
        %879 = vmatmul.mubr.f32.gmra.mxu0 %v807
        %v880 = vpop.f32.mrf.mxu0
        %v881 = vadd.f32 %v800, %v880
        %v882 = vpop.f32.mrf.mxu0
        %883 = vdwg.mxu0
        %v884 = vld [vmem:[#allocation2 + $0x1] sm:$0xff]
        %v885 = vld [vmem:[#allocation2 + $0x9] sm:$0xff]
        %s886 = scalar_lea.vmem [#allocation10], 64
        %v887 = vld [vmem:[%s886] sm:$0xff]
        %v888 = vld [vmem:[%s886 + $0x8] sm:$0xff]
        %v889 = vld [vmem:[%s886 + $0x10] sm:$0xff]
        %v890 = vld [vmem:[%s886 + $0x18] sm:$0xff]
        %v891 = vld [vmem:[%s886 + $0x20] sm:$0xff]
        %v892 = vld [vmem:[%s886 + $0x28] sm:$0xff]
        %v893 = vld [vmem:[%s886 + $0x30] sm:$0xff]
        %v894 = vld [vmem:[%s886 + $0x38] sm:$0xff]
        %v896 = vsel %vm607, %v884, 0
        %v899 = vsel %vm607, %v885, 0
        %901 = vmatprep.subr.mxu0 0.0
        %902 = vmatpush1.msra.mxu0 0.0
        %903 = vmatprep.subr.mxu0 0.0
        %904 = vmatpush1.msra.mxu0 0.0
        %905 = vmatprep.subr.mxu0 0.0
        %906 = vmatpush1.msra.mxu0 0.0
        %907 = vmatprep.subr.mxu0 0.0
        %908 = vmatpush1.msra.mxu0 0.0
        %909 = vmatprep.subr.mxu0 0.0
        %910 = vmatpush1.msra.mxu0 0.0
        %911 = vmatprep.subr.mxu0 0.0
        %912 = vmatpush1.msra.mxu0 0.0
        %913 = vmatprep.subr.mxu0 0.0
        %914 = vmatpush1.msra.mxu0 0.0
        %915 = vmatprep.subr.mxu0 0.0
        %916 = vmatpush1.msra.mxu0 0.0
        %917 = vmatprep.subr.mxu0 0.0
        %918 = vmatpush1.msra.mxu0 %v894
        %919 = vmatprep.subr.mxu0 0.0
        %920 = vmatpush1.msra.mxu0 %v893
        %921 = vmatprep.subr.mxu0 0.0
        %922 = vmatpush1.msra.mxu0 %v892
        %923 = vmatprep.subr.mxu0 0.0
        %924 = vmatpush1.msra.mxu0 %v891
        %925 = vmatprep.subr.mxu0 0.0
        %926 = vmatpush1.msra.mxu0 %v890
        %927 = vmatprep.subr.mxu0 0.0
        %928 = vmatpush1.msra.mxu0 %v889
        %929 = vmatprep.subr.mxu0 0.0
        %930 = vmatpush1.msra.mxu0 %v888
        %931 = vmatprep.subr.mxu0 0.0
        %932 = vmatpush1.msra.mxu0 %v887
        %933 = vmatprep.subr.mxu0 0.0
        %934 = vmatpush2.msra.mxu0 0.0
        %935 = vmatprep.subr.mxu0 0.0
        %936 = vmatpush2.msra.mxu0 0.0
        %937 = vmatprep.subr.mxu0 0.0
        %938 = vmatpush2.msra.mxu0 0.0
        %939 = vmatprep.subr.mxu0 0.0
        %940 = vmatpush2.msra.mxu0 0.0
        %941 = vmatprep.subr.mxu0 0.0
        %942 = vmatpush2.msra.mxu0 0.0
        %943 = vmatprep.subr.mxu0 0.0
        %944 = vmatpush2.msra.mxu0 0.0
        %945 = vmatprep.subr.mxu0 0.0
        %946 = vmatpush2.msra.mxu0 0.0
        %947 = vmatprep.subr.mxu0 0.0
        %948 = vmatpush2.msra.mxu0 0.0
        %949 = vmatprep.subr.mxu0 0.0
        %950 = vmatpush2.msra.mxu0 0.0
        %951 = vmatprep.subr.mxu0 0.0
        %952 = vmatpush2.msra.mxu0 0.0
        %953 = vmatprep.subr.mxu0 0.0
        %954 = vmatpush2.msra.mxu0 0.0
        %955 = vmatprep.subr.mxu0 0.0
        %956 = vmatpush2.msra.mxu0 0.0
        %957 = vmatprep.subr.mxu0 0.0
        %958 = vmatpush2.msra.mxu0 0.0
        %959 = vmatprep.subr.mxu0 0.0
        %960 = vmatpush2.msra.mxu0 0.0
        %961 = vmatprep.subr.mxu0 0.0
        %962 = vmatpush2.msra.mxu0 0.0
        %963 = vmatprep.subr.mxu0 0.0
        %964 = vmatpush2.msra.mxu0 0.0
        %965 = vmatprep.mubr.f32.mxu0 0.0
        %966 = vmatmul.mubr.f32.gmra.mxu0 %v896
        %v967 = vpop.f32.mrf.mxu0
        %v968 = vadd.f32 0.0, %v967
        %v969 = vpop.f32.mrf.mxu0
        %970 = vmatprep.mubr.f32.mxu0 0.0
        %971 = vmatmul.mubr.f32.gmra.mxu0 %v899
        %v972 = vpop.f32.mrf.mxu0
        %v973 = vadd.f32 0.0, %v972
        %v974 = vpop.f32.mrf.mxu0
        %975 = vdwg.mxu0
        %v976 = vadd.f32 %v876, %v968
        %v977 = vadd.f32 %v881, %v973
        %v978 = vld [vmem:[#allocation3 + $0x1] sm:$0xff]
        %v979 = vld [vmem:[#allocation3 + $0x9] sm:$0xff]
        %s980 = scalar_lea.vmem [#allocation11], 64
        %v981 = vld [vmem:[%s980] sm:$0xff]
        %v982 = vld [vmem:[%s980 + $0x8] sm:$0xff]
        %v983 = vld [vmem:[%s980 + $0x10] sm:$0xff]
        %v984 = vld [vmem:[%s980 + $0x18] sm:$0xff]
        %v985 = vld [vmem:[%s980 + $0x20] sm:$0xff]
        %v986 = vld [vmem:[%s980 + $0x28] sm:$0xff]
        %v987 = vld [vmem:[%s980 + $0x30] sm:$0xff]
        %v988 = vld [vmem:[%s980 + $0x38] sm:$0xff]
        %v990 = vsel %vm607, %v978, 0
        %v993 = vsel %vm607, %v979, 0
        %995 = vmatprep.subr.mxu0 0.0
        %996 = vmatpush1.msra.mxu0 0.0
        %997 = vmatprep.subr.mxu0 0.0
        %998 = vmatpush1.msra.mxu0 0.0
        %999 = vmatprep.subr.mxu0 0.0
        %1000 = vmatpush1.msra.mxu0 0.0
        %1001 = vmatprep.subr.mxu0 0.0
        %1002 = vmatpush1.msra.mxu0 0.0
        %1003 = vmatprep.subr.mxu0 0.0
        %1004 = vmatpush1.msra.mxu0 0.0
        %1005 = vmatprep.subr.mxu0 0.0
        %1006 = vmatpush1.msra.mxu0 0.0
        %1007 = vmatprep.subr.mxu0 0.0
        %1008 = vmatpush1.msra.mxu0 0.0
        %1009 = vmatprep.subr.mxu0 0.0
        %1010 = vmatpush1.msra.mxu0 0.0
        %1011 = vmatprep.subr.mxu0 0.0
        %1012 = vmatpush1.msra.mxu0 %v988
        %1013 = vmatprep.subr.mxu0 0.0
        %1014 = vmatpush1.msra.mxu0 %v987
        %1015 = vmatprep.subr.mxu0 0.0
        %1016 = vmatpush1.msra.mxu0 %v986
        %1017 = vmatprep.subr.mxu0 0.0
        %1018 = vmatpush1.msra.mxu0 %v985
        %1019 = vmatprep.subr.mxu0 0.0
        %1020 = vmatpush1.msra.mxu0 %v984
        %1021 = vmatprep.subr.mxu0 0.0
        %1022 = vmatpush1.msra.mxu0 %v983
        %1023 = vmatprep.subr.mxu0 0.0
        %1024 = vmatpush1.msra.mxu0 %v982
        %1025 = vmatprep.subr.mxu0 0.0
        %1026 = vmatpush1.msra.mxu0 %v981
        %1027 = vmatprep.subr.mxu0 0.0
        %1028 = vmatpush2.msra.mxu0 0.0
        %1029 = vmatprep.subr.mxu0 0.0
        %1030 = vmatpush2.msra.mxu0 0.0
        %1031 = vmatprep.subr.mxu0 0.0
        %1032 = vmatpush2.msra.mxu0 0.0
        %1033 = vmatprep.subr.mxu0 0.0
        %1034 = vmatpush2.msra.mxu0 0.0
        %1035 = vmatprep.subr.mxu0 0.0
        %1036 = vmatpush2.msra.mxu0 0.0
        %1037 = vmatprep.subr.mxu0 0.0
        %1038 = vmatpush2.msra.mxu0 0.0
        %1039 = vmatprep.subr.mxu0 0.0
        %1040 = vmatpush2.msra.mxu0 0.0
        %1041 = vmatprep.subr.mxu0 0.0
        %1042 = vmatpush2.msra.mxu0 0.0
        %1043 = vmatprep.subr.mxu0 0.0
        %1044 = vmatpush2.msra.mxu0 0.0
        %1045 = vmatprep.subr.mxu0 0.0
        %1046 = vmatpush2.msra.mxu0 0.0
        %1047 = vmatprep.subr.mxu0 0.0
        %1048 = vmatpush2.msra.mxu0 0.0
        %1049 = vmatprep.subr.mxu0 0.0
        %1050 = vmatpush2.msra.mxu0 0.0
        %1051 = vmatprep.subr.mxu0 0.0
        %1052 = vmatpush2.msra.mxu0 0.0
        %1053 = vmatprep.subr.mxu0 0.0
        %1054 = vmatpush2.msra.mxu0 0.0
        %1055 = vmatprep.subr.mxu0 0.0
        %1056 = vmatpush2.msra.mxu0 0.0
        %1057 = vmatprep.subr.mxu0 0.0
        %1058 = vmatpush2.msra.mxu0 0.0
        %1059 = vmatprep.mubr.f32.mxu0 0.0
        %1060 = vmatmul.mubr.f32.gmra.mxu0 %v990
        %v1061 = vpop.f32.mrf.mxu0
        %v1062 = vadd.f32 0.0, %v1061
        %v1063 = vpop.f32.mrf.mxu0
        %1064 = vmatprep.mubr.f32.mxu0 0.0
        %1065 = vmatmul.mubr.f32.gmra.mxu0 %v993
        %v1066 = vpop.f32.mrf.mxu0
        %v1067 = vadd.f32 0.0, %v1066
        %v1068 = vpop.f32.mrf.mxu0
        %1069 = vdwg.mxu0
        %v1070 = vadd.f32 %v976, %v1062
        %v1071 = vadd.f32 %v977, %v1067
        %v1072 = vld [vmem:[#allocation2 + $0x2] sm:$0xff]
        %v1073 = vld [vmem:[#allocation2 + $0xa] sm:$0xff]
        %s1074 = scalar_lea.vmem [#allocation10], 128
        %v1075 = vld [vmem:[%s1074] sm:$0xff]
        %v1076 = vld [vmem:[%s1074 + $0x8] sm:$0xff]
        %v1077 = vld [vmem:[%s1074 + $0x10] sm:$0xff]
        %v1078 = vld [vmem:[%s1074 + $0x18] sm:$0xff]
        %v1079 = vld [vmem:[%s1074 + $0x20] sm:$0xff]
        %v1080 = vld [vmem:[%s1074 + $0x28] sm:$0xff]
        %v1081 = vld [vmem:[%s1074 + $0x30] sm:$0xff]
        %v1082 = vld [vmem:[%s1074 + $0x38] sm:$0xff]
        %v1084 = vsel %vm607, %v1072, 0
        %v1087 = vsel %vm607, %v1073, 0
        %1089 = vmatprep.subr.mxu0 0.0
        %1090 = vmatpush1.msra.mxu0 0.0
        %1091 = vmatprep.subr.mxu0 0.0
        %1092 = vmatpush1.msra.mxu0 0.0
        %1093 = vmatprep.subr.mxu0 0.0
        %1094 = vmatpush1.msra.mxu0 0.0
        %1095 = vmatprep.subr.mxu0 0.0
        %1096 = vmatpush1.msra.mxu0 0.0
        %1097 = vmatprep.subr.mxu0 0.0
        %1098 = vmatpush1.msra.mxu0 0.0
        %1099 = vmatprep.subr.mxu0 0.0
        %1100 = vmatpush1.msra.mxu0 0.0
        %1101 = vmatprep.subr.mxu0 0.0
        %1102 = vmatpush1.msra.mxu0 0.0
        %1103 = vmatprep.subr.mxu0 0.0
        %1104 = vmatpush1.msra.mxu0 0.0
        %1105 = vmatprep.subr.mxu0 0.0
        %1106 = vmatpush1.msra.mxu0 %v1082
        %1107 = vmatprep.subr.mxu0 0.0
        %1108 = vmatpush1.msra.mxu0 %v1081
        %1109 = vmatprep.subr.mxu0 0.0
        %1110 = vmatpush1.msra.mxu0 %v1080
        %1111 = vmatprep.subr.mxu0 0.0
        %1112 = vmatpush1.msra.mxu0 %v1079
        %1113 = vmatprep.subr.mxu0 0.0
        %1114 = vmatpush1.msra.mxu0 %v1078
        %1115 = vmatprep.subr.mxu0 0.0
        %1116 = vmatpush1.msra.mxu0 %v1077
        %1117 = vmatprep.subr.mxu0 0.0
        %1118 = vmatpush1.msra.mxu0 %v1076
        %1119 = vmatprep.subr.mxu0 0.0
        %1120 = vmatpush1.msra.mxu0 %v1075
        %1121 = vmatprep.subr.mxu0 0.0
        %1122 = vmatpush2.msra.mxu0 0.0
        %1123 = vmatprep.subr.mxu0 0.0
        %1124 = vmatpush2.msra.mxu0 0.0
        %1125 = vmatprep.subr.mxu0 0.0
        %1126 = vmatpush2.msra.mxu0 0.0
        %1127 = vmatprep.subr.mxu0 0.0
        %1128 = vmatpush2.msra.mxu0 0.0
        %1129 = vmatprep.subr.mxu0 0.0
        %1130 = vmatpush2.msra.mxu0 0.0
        %1131 = vmatprep.subr.mxu0 0.0
        %1132 = vmatpush2.msra.mxu0 0.0
        %1133 = vmatprep.subr.mxu0 0.0
        %1134 = vmatpush2.msra.mxu0 0.0
        %1135 = vmatprep.subr.mxu0 0.0
        %1136 = vmatpush2.msra.mxu0 0.0
        %1137 = vmatprep.subr.mxu0 0.0
        %1138 = vmatpush2.msra.mxu0 0.0
        %1139 = vmatprep.subr.mxu0 0.0
        %1140 = vmatpush2.msra.mxu0 0.0
        %1141 = vmatprep.subr.mxu0 0.0
        %1142 = vmatpush2.msra.mxu0 0.0
        %1143 = vmatprep.subr.mxu0 0.0
        %1144 = vmatpush2.msra.mxu0 0.0
        %1145 = vmatprep.subr.mxu0 0.0
        %1146 = vmatpush2.msra.mxu0 0.0
        %1147 = vmatprep.subr.mxu0 0.0
        %1148 = vmatpush2.msra.mxu0 0.0
        %1149 = vmatprep.subr.mxu0 0.0
        %1150 = vmatpush2.msra.mxu0 0.0
        %1151 = vmatprep.subr.mxu0 0.0
        %1152 = vmatpush2.msra.mxu0 0.0
        %1153 = vmatprep.mubr.f32.mxu0 0.0
        %1154 = vmatmul.mubr.f32.gmra.mxu0 %v1084
        %v1155 = vpop.f32.mrf.mxu0
        %v1156 = vadd.f32 0.0, %v1155
        %v1157 = vpop.f32.mrf.mxu0
        %1158 = vmatprep.mubr.f32.mxu0 0.0
        %1159 = vmatmul.mubr.f32.gmra.mxu0 %v1087
        %v1160 = vpop.f32.mrf.mxu0
        %v1161 = vadd.f32 0.0, %v1160
        %v1162 = vpop.f32.mrf.mxu0
        %1163 = vdwg.mxu0
        %v1164 = vadd.f32 %v1070, %v1156
        %v1165 = vadd.f32 %v1071, %v1161
        %v1166 = vld [vmem:[#allocation3 + $0x2] sm:$0xff]
        %v1167 = vld [vmem:[#allocation3 + $0xa] sm:$0xff]
        %s1168 = scalar_lea.vmem [#allocation11], 128
        %v1169 = vld [vmem:[%s1168] sm:$0xff]
        %v1170 = vld [vmem:[%s1168 + $0x8] sm:$0xff]
        %v1171 = vld [vmem:[%s1168 + $0x10] sm:$0xff]
        %v1172 = vld [vmem:[%s1168 + $0x18] sm:$0xff]
        %v1173 = vld [vmem:[%s1168 + $0x20] sm:$0xff]
        %v1174 = vld [vmem:[%s1168 + $0x28] sm:$0xff]
        %v1175 = vld [vmem:[%s1168 + $0x30] sm:$0xff]
        %v1176 = vld [vmem:[%s1168 + $0x38] sm:$0xff]
        %v1178 = vsel %vm607, %v1166, 0
        %v1181 = vsel %vm607, %v1167, 0
        %1183 = vmatprep.subr.mxu0 0.0
        %1184 = vmatpush1.msra.mxu0 0.0
        %1185 = vmatprep.subr.mxu0 0.0
        %1186 = vmatpush1.msra.mxu0 0.0
        %1187 = vmatprep.subr.mxu0 0.0
        %1188 = vmatpush1.msra.mxu0 0.0
        %1189 = vmatprep.subr.mxu0 0.0
        %1190 = vmatpush1.msra.mxu0 0.0
        %1191 = vmatprep.subr.mxu0 0.0
        %1192 = vmatpush1.msra.mxu0 0.0
        %1193 = vmatprep.subr.mxu0 0.0
        %1194 = vmatpush1.msra.mxu0 0.0
        %1195 = vmatprep.subr.mxu0 0.0
        %1196 = vmatpush1.msra.mxu0 0.0
        %1197 = vmatprep.subr.mxu0 0.0
        %1198 = vmatpush1.msra.mxu0 0.0
        %1199 = vmatprep.subr.mxu0 0.0
        %1200 = vmatpush1.msra.mxu0 %v1176
        %1201 = vmatprep.subr.mxu0 0.0
        %1202 = vmatpush1.msra.mxu0 %v1175
        %1203 = vmatprep.subr.mxu0 0.0
        %1204 = vmatpush1.msra.mxu0 %v1174
        %1205 = vmatprep.subr.mxu0 0.0
        %1206 = vmatpush1.msra.mxu0 %v1173
        %1207 = vmatprep.subr.mxu0 0.0
        %1208 = vmatpush1.msra.mxu0 %v1172
        %1209 = vmatprep.subr.mxu0 0.0
        %1210 = vmatpush1.msra.mxu0 %v1171
        %1211 = vmatprep.subr.mxu0 0.0
        %1212 = vmatpush1.msra.mxu0 %v1170
        %1213 = vmatprep.subr.mxu0 0.0
        %1214 = vmatpush1.msra.mxu0 %v1169
        %1215 = vmatprep.subr.mxu0 0.0
        %1216 = vmatpush2.msra.mxu0 0.0
        %1217 = vmatprep.subr.mxu0 0.0
        %1218 = vmatpush2.msra.mxu0 0.0
        %1219 = vmatprep.subr.mxu0 0.0
        %1220 = vmatpush2.msra.mxu0 0.0
        %1221 = vmatprep.subr.mxu0 0.0
        %1222 = vmatpush2.msra.mxu0 0.0
        %1223 = vmatprep.subr.mxu0 0.0
        %1224 = vmatpush2.msra.mxu0 0.0
        %1225 = vmatprep.subr.mxu0 0.0
        %1226 = vmatpush2.msra.mxu0 0.0
        %1227 = vmatprep.subr.mxu0 0.0
        %1228 = vmatpush2.msra.mxu0 0.0
        %1229 = vmatprep.subr.mxu0 0.0
        %1230 = vmatpush2.msra.mxu0 0.0
        %1231 = vmatprep.subr.mxu0 0.0
        %1232 = vmatpush2.msra.mxu0 0.0
        %1233 = vmatprep.subr.mxu0 0.0
        %1234 = vmatpush2.msra.mxu0 0.0
        %1235 = vmatprep.subr.mxu0 0.0
        %1236 = vmatpush2.msra.mxu0 0.0
        %1237 = vmatprep.subr.mxu0 0.0
        %1238 = vmatpush2.msra.mxu0 0.0
        %1239 = vmatprep.subr.mxu0 0.0
        %1240 = vmatpush2.msra.mxu0 0.0
        %1241 = vmatprep.subr.mxu0 0.0
        %1242 = vmatpush2.msra.mxu0 0.0
        %1243 = vmatprep.subr.mxu0 0.0
        %1244 = vmatpush2.msra.mxu0 0.0
        %1245 = vmatprep.subr.mxu0 0.0
        %1246 = vmatpush2.msra.mxu0 0.0
        %1247 = vmatprep.mubr.f32.mxu0 0.0
        %1248 = vmatmul.mubr.f32.gmra.mxu0 %v1178
        %v1249 = vpop.f32.mrf.mxu0
        %v1250 = vadd.f32 0.0, %v1249
        %v1251 = vpop.f32.mrf.mxu0
        %1252 = vmatprep.mubr.f32.mxu0 0.0
        %1253 = vmatmul.mubr.f32.gmra.mxu0 %v1181
        %v1254 = vpop.f32.mrf.mxu0
        %v1255 = vadd.f32 0.0, %v1254
        %v1256 = vpop.f32.mrf.mxu0
        %1257 = vdwg.mxu0
        %v1258 = vadd.f32 %v1164, %v1250
        %v1259 = vadd.f32 %v1165, %v1255
        %v1260 = vld [vmem:[%s7] sm:$0x1]
        %v1262 = vlaneseq
        %v1263 = vshrl.u32 %v1262, 7
        %v1264 = vsub.s32 0, %v1263
        %v1265 = vrot.slane %v1260, %v1264
        %v1267 = vmul.f32 %v1258, %v1265
        %v1268 = vmul.f32 %v1259, %v1265
        %v1269 = vld [vmem:[%s8] sm:$0x1]
        %v1271 = vlaneseq
        %v1272 = vshrl.u32 %v1271, 7
        %v1273 = vsub.s32 0, %v1272
        %v1274 = vrot.slane %v1269, %v1273
        %v1276 = vadd.f32 %v1267, %v1274
        %v1277 = vadd.f32 %v1268, %v1274
        %v1278 = vmax.f32 %v1276, 0.0
        %v1279 = vmax.f32 %v1277, 0.0
        %1280 = vst.msk [vmem:[#allocation4 + $0x1] sm:$0xff] %vm607, %v1278
        %1281 = vst.msk [vmem:[#allocation4 + $0x9] sm:$0xff] %vm607, %v1279
        %v1282 = vld [vmem:[#allocation4] sm:$0xff]
        %v1283 = vld [vmem:[#allocation4 + $0x8] sm:$0xff]
        %v1284 = vld [vmem:[#allocation13] sm:$0xff]
        %v1285 = vld [vmem:[#allocation13 + $0x8] sm:$0xff]
        %v1286 = vld [vmem:[#allocation13 + $0x10] sm:$0xff]
        %v1287 = vld [vmem:[#allocation13 + $0x18] sm:$0xff]
        %v1288 = vld [vmem:[#allocation13 + $0x20] sm:$0xff]
        %v1289 = vld [vmem:[#allocation13 + $0x28] sm:$0xff]
        %v1290 = vld [vmem:[#allocation13 + $0x30] sm:$0xff]
        %v1291 = vld [vmem:[#allocation13 + $0x38] sm:$0xff]
        %v1292 = vld [vmem:[#allocation4 + $0x1] sm:$0xff]
        %v1293 = vld [vmem:[#allocation4 + $0x9] sm:$0xff]
        %s1294 = scalar_lea.vmem [#allocation13], 64
        %v1295 = vld [vmem:[%s1294] sm:$0xff]
        %v1296 = vld [vmem:[%s1294 + $0x8] sm:$0xff]
        %v1297 = vld [vmem:[%s1294 + $0x10] sm:$0xff]
        %v1298 = vld [vmem:[%s1294 + $0x18] sm:$0xff]
        %v1299 = vld [vmem:[%s1294 + $0x20] sm:$0xff]
        %v1300 = vld [vmem:[%s1294 + $0x28] sm:$0xff]
        %v1301 = vld [vmem:[%s1294 + $0x30] sm:$0xff]
        %v1302 = vld [vmem:[%s1294 + $0x38] sm:$0xff]
        %v1304 = vsel %vm607, %v1292, 0
        %v1307 = vsel %vm607, %v1293, 0
        %1309 = vmatprep.subr.mxu0 0.0
        %1310 = vmatpush1.msra.mxu0 0.0
        %1311 = vmatprep.subr.mxu0 0.0
        %1312 = vmatpush1.msra.mxu0 0.0
        %1313 = vmatprep.subr.mxu0 0.0
        %1314 = vmatpush1.msra.mxu0 0.0
        %1315 = vmatprep.subr.mxu0 0.0
        %1316 = vmatpush1.msra.mxu0 0.0
        %1317 = vmatprep.subr.mxu0 0.0
        %1318 = vmatpush1.msra.mxu0 0.0
        %1319 = vmatprep.subr.mxu0 0.0
        %1320 = vmatpush1.msra.mxu0 0.0
        %1321 = vmatprep.subr.mxu0 0.0
        %1322 = vmatpush1.msra.mxu0 0.0
        %1323 = vmatprep.subr.mxu0 0.0
        %1324 = vmatpush1.msra.mxu0 0.0
        %1325 = vmatprep.subr.mxu0 0.0
        %1326 = vmatpush1.msra.mxu0 %v1302
        %1327 = vmatprep.subr.mxu0 0.0
        %1328 = vmatpush1.msra.mxu0 %v1301
        %1329 = vmatprep.subr.mxu0 0.0
        %1330 = vmatpush1.msra.mxu0 %v1300
        %1331 = vmatprep.subr.mxu0 0.0
        %1332 = vmatpush1.msra.mxu0 %v1299
        %1333 = vmatprep.subr.mxu0 0.0
        %1334 = vmatpush1.msra.mxu0 %v1298
        %1335 = vmatprep.subr.mxu0 0.0
        %1336 = vmatpush1.msra.mxu0 %v1297
        %1337 = vmatprep.subr.mxu0 0.0
        %1338 = vmatpush1.msra.mxu0 %v1296
        %1339 = vmatprep.subr.mxu0 0.0
        %1340 = vmatpush1.msra.mxu0 %v1295
        %1341 = vmatprep.subr.mxu0 0.0
        %1342 = vmatpush2.msra.mxu0 0.0
        %1343 = vmatprep.subr.mxu0 0.0
        %1344 = vmatpush2.msra.mxu0 0.0
        %1345 = vmatprep.subr.mxu0 0.0
        %1346 = vmatpush2.msra.mxu0 0.0
        %1347 = vmatprep.subr.mxu0 0.0
        %1348 = vmatpush2.msra.mxu0 0.0
        %1349 = vmatprep.subr.mxu0 0.0
        %1350 = vmatpush2.msra.mxu0 0.0
        %1351 = vmatprep.subr.mxu0 0.0
        %1352 = vmatpush2.msra.mxu0 0.0
        %1353 = vmatprep.subr.mxu0 0.0
        %1354 = vmatpush2.msra.mxu0 0.0
        %1355 = vmatprep.subr.mxu0 0.0
        %1356 = vmatpush2.msra.mxu0 0.0
        %1357 = vmatprep.subr.mxu0 0.0
        %1358 = vmatpush2.msra.mxu0 0.0
        %1359 = vmatprep.subr.mxu0 0.0
        %1360 = vmatpush2.msra.mxu0 0.0
        %1361 = vmatprep.subr.mxu0 0.0
        %1362 = vmatpush2.msra.mxu0 0.0
        %1363 = vmatprep.subr.mxu0 0.0
        %1364 = vmatpush2.msra.mxu0 0.0
        %1365 = vmatprep.subr.mxu0 0.0
        %1366 = vmatpush2.msra.mxu0 0.0
        %1367 = vmatprep.subr.mxu0 0.0
        %1368 = vmatpush2.msra.mxu0 0.0
        %1369 = vmatprep.subr.mxu0 0.0
        %1370 = vmatpush2.msra.mxu0 0.0
        %1371 = vmatprep.subr.mxu0 0.0
        %1372 = vmatpush2.msra.mxu0 0.0
        %1373 = vmatprep.mubr.f32.mxu0 0.0
        %1374 = vmatmul.mubr.f32.gmra.mxu0 %v1304
        %v1375 = vpop.f32.mrf.mxu0
        %v1376 = vadd.f32 0.0, %v1375
        %v1377 = vpop.f32.mrf.mxu0
        %1378 = vmatprep.mubr.f32.mxu0 0.0
        %1379 = vmatmul.mubr.f32.gmra.mxu0 %v1307
        %v1380 = vpop.f32.mrf.mxu0
        %v1381 = vadd.f32 0.0, %v1380
        %v1382 = vpop.f32.mrf.mxu0
        %1383 = vdwg.mxu0
        %v1385 = vsel %vm607, %v1282, 0
        %v1388 = vsel %vm607, %v1283, 0
        %1390 = vmatprep.subr.mxu0 0.0
        %1391 = vmatpush1.msra.mxu0 0.0
        %1392 = vmatprep.subr.mxu0 0.0
        %1393 = vmatpush1.msra.mxu0 0.0
        %1394 = vmatprep.subr.mxu0 0.0
        %1395 = vmatpush1.msra.mxu0 0.0
        %1396 = vmatprep.subr.mxu0 0.0
        %1397 = vmatpush1.msra.mxu0 0.0
        %1398 = vmatprep.subr.mxu0 0.0
        %1399 = vmatpush1.msra.mxu0 0.0
        %1400 = vmatprep.subr.mxu0 0.0
        %1401 = vmatpush1.msra.mxu0 0.0
        %1402 = vmatprep.subr.mxu0 0.0
        %1403 = vmatpush1.msra.mxu0 0.0
        %1404 = vmatprep.subr.mxu0 0.0
        %1405 = vmatpush1.msra.mxu0 0.0
        %1406 = vmatprep.subr.mxu0 0.0
        %1407 = vmatpush1.msra.mxu0 %v1291
        %1408 = vmatprep.subr.mxu0 0.0
        %1409 = vmatpush1.msra.mxu0 %v1290
        %1410 = vmatprep.subr.mxu0 0.0
        %1411 = vmatpush1.msra.mxu0 %v1289
        %1412 = vmatprep.subr.mxu0 0.0
        %1413 = vmatpush1.msra.mxu0 %v1288
        %1414 = vmatprep.subr.mxu0 0.0
        %1415 = vmatpush1.msra.mxu0 %v1287
        %1416 = vmatprep.subr.mxu0 0.0
        %1417 = vmatpush1.msra.mxu0 %v1286
        %1418 = vmatprep.subr.mxu0 0.0
        %1419 = vmatpush1.msra.mxu0 %v1285
        %1420 = vmatprep.subr.mxu0 0.0
        %1421 = vmatpush1.msra.mxu0 %v1284
        %1422 = vmatprep.subr.mxu0 0.0
        %1423 = vmatpush2.msra.mxu0 0.0
        %1424 = vmatprep.subr.mxu0 0.0
        %1425 = vmatpush2.msra.mxu0 0.0
        %1426 = vmatprep.subr.mxu0 0.0
        %1427 = vmatpush2.msra.mxu0 0.0
        %1428 = vmatprep.subr.mxu0 0.0
        %1429 = vmatpush2.msra.mxu0 0.0
        %1430 = vmatprep.subr.mxu0 0.0
        %1431 = vmatpush2.msra.mxu0 0.0
        %1432 = vmatprep.subr.mxu0 0.0
        %1433 = vmatpush2.msra.mxu0 0.0
        %1434 = vmatprep.subr.mxu0 0.0
        %1435 = vmatpush2.msra.mxu0 0.0
        %1436 = vmatprep.subr.mxu0 0.0
        %1437 = vmatpush2.msra.mxu0 0.0
        %1438 = vmatprep.subr.mxu0 0.0
        %1439 = vmatpush2.msra.mxu0 0.0
        %1440 = vmatprep.subr.mxu0 0.0
        %1441 = vmatpush2.msra.mxu0 0.0
        %1442 = vmatprep.subr.mxu0 0.0
        %1443 = vmatpush2.msra.mxu0 0.0
        %1444 = vmatprep.subr.mxu0 0.0
        %1445 = vmatpush2.msra.mxu0 0.0
        %1446 = vmatprep.subr.mxu0 0.0
        %1447 = vmatpush2.msra.mxu0 0.0
        %1448 = vmatprep.subr.mxu0 0.0
        %1449 = vmatpush2.msra.mxu0 0.0
        %1450 = vmatprep.subr.mxu0 0.0
        %1451 = vmatpush2.msra.mxu0 0.0
        %1452 = vmatprep.subr.mxu0 0.0
        %1453 = vmatpush2.msra.mxu0 0.0
        %1454 = vmatprep.mubr.f32.mxu0 0.0
        %1455 = vmatmul.mubr.f32.gmra.mxu0 %v1385
        %v1456 = vpop.f32.mrf.mxu0
        %v1457 = vadd.f32 %v1376, %v1456
        %v1458 = vpop.f32.mrf.mxu0
        %1459 = vmatprep.mubr.f32.mxu0 0.0
        %1460 = vmatmul.mubr.f32.gmra.mxu0 %v1388
        %v1461 = vpop.f32.mrf.mxu0
        %v1462 = vadd.f32 %v1381, %v1461
        %v1463 = vpop.f32.mrf.mxu0
        %1464 = vdwg.mxu0
        %v1465 = vld [vmem:[#allocation4 + $0x2] sm:$0xff]
        %v1466 = vld [vmem:[#allocation4 + $0xa] sm:$0xff]
        %s1467 = scalar_lea.vmem [#allocation13], 128
        %v1468 = vld [vmem:[%s1467] sm:$0xff]
        %v1469 = vld [vmem:[%s1467 + $0x8] sm:$0xff]
        %v1470 = vld [vmem:[%s1467 + $0x10] sm:$0xff]
        %v1471 = vld [vmem:[%s1467 + $0x18] sm:$0xff]
        %v1472 = vld [vmem:[%s1467 + $0x20] sm:$0xff]
        %v1473 = vld [vmem:[%s1467 + $0x28] sm:$0xff]
        %v1474 = vld [vmem:[%s1467 + $0x30] sm:$0xff]
        %v1475 = vld [vmem:[%s1467 + $0x38] sm:$0xff]
        %v1477 = vsel %vm607, %v1465, 0
        %v1480 = vsel %vm607, %v1466, 0
        %1482 = vmatprep.subr.mxu0 0.0
        %1483 = vmatpush1.msra.mxu0 0.0
        %1484 = vmatprep.subr.mxu0 0.0
        %1485 = vmatpush1.msra.mxu0 0.0
        %1486 = vmatprep.subr.mxu0 0.0
        %1487 = vmatpush1.msra.mxu0 0.0
        %1488 = vmatprep.subr.mxu0 0.0
        %1489 = vmatpush1.msra.mxu0 0.0
        %1490 = vmatprep.subr.mxu0 0.0
        %1491 = vmatpush1.msra.mxu0 0.0
        %1492 = vmatprep.subr.mxu0 0.0
        %1493 = vmatpush1.msra.mxu0 0.0
        %1494 = vmatprep.subr.mxu0 0.0
        %1495 = vmatpush1.msra.mxu0 0.0
        %1496 = vmatprep.subr.mxu0 0.0
        %1497 = vmatpush1.msra.mxu0 0.0
        %1498 = vmatprep.subr.mxu0 0.0
        %1499 = vmatpush1.msra.mxu0 %v1475
        %1500 = vmatprep.subr.mxu0 0.0
        %1501 = vmatpush1.msra.mxu0 %v1474
        %1502 = vmatprep.subr.mxu0 0.0
        %1503 = vmatpush1.msra.mxu0 %v1473
        %1504 = vmatprep.subr.mxu0 0.0
        %1505 = vmatpush1.msra.mxu0 %v1472
        %1506 = vmatprep.subr.mxu0 0.0
        %1507 = vmatpush1.msra.mxu0 %v1471
        %1508 = vmatprep.subr.mxu0 0.0
        %1509 = vmatpush1.msra.mxu0 %v1470
        %1510 = vmatprep.subr.mxu0 0.0
        %1511 = vmatpush1.msra.mxu0 %v1469
        %1512 = vmatprep.subr.mxu0 0.0
        %1513 = vmatpush1.msra.mxu0 %v1468
        %1514 = vmatprep.subr.mxu0 0.0
        %1515 = vmatpush2.msra.mxu0 0.0
        %1516 = vmatprep.subr.mxu0 0.0
        %1517 = vmatpush2.msra.mxu0 0.0
        %1518 = vmatprep.subr.mxu0 0.0
        %1519 = vmatpush2.msra.mxu0 0.0
        %1520 = vmatprep.subr.mxu0 0.0
        %1521 = vmatpush2.msra.mxu0 0.0
        %1522 = vmatprep.subr.mxu0 0.0
        %1523 = vmatpush2.msra.mxu0 0.0
        %1524 = vmatprep.subr.mxu0 0.0
        %1525 = vmatpush2.msra.mxu0 0.0
        %1526 = vmatprep.subr.mxu0 0.0
        %1527 = vmatpush2.msra.mxu0 0.0
        %1528 = vmatprep.subr.mxu0 0.0
        %1529 = vmatpush2.msra.mxu0 0.0
        %1530 = vmatprep.subr.mxu0 0.0
        %1531 = vmatpush2.msra.mxu0 0.0
        %1532 = vmatprep.subr.mxu0 0.0
        %1533 = vmatpush2.msra.mxu0 0.0
        %1534 = vmatprep.subr.mxu0 0.0
        %1535 = vmatpush2.msra.mxu0 0.0
        %1536 = vmatprep.subr.mxu0 0.0
        %1537 = vmatpush2.msra.mxu0 0.0
        %1538 = vmatprep.subr.mxu0 0.0
        %1539 = vmatpush2.msra.mxu0 0.0
        %1540 = vmatprep.subr.mxu0 0.0
        %1541 = vmatpush2.msra.mxu0 0.0
        %1542 = vmatprep.subr.mxu0 0.0
        %1543 = vmatpush2.msra.mxu0 0.0
        %1544 = vmatprep.subr.mxu0 0.0
        %1545 = vmatpush2.msra.mxu0 0.0
        %1546 = vmatprep.mubr.f32.mxu0 0.0
        %1547 = vmatmul.mubr.f32.gmra.mxu0 %v1477
        %v1548 = vpop.f32.mrf.mxu0
        %v1549 = vadd.f32 0.0, %v1548
        %v1550 = vpop.f32.mrf.mxu0
        %1551 = vmatprep.mubr.f32.mxu0 0.0
        %1552 = vmatmul.mubr.f32.gmra.mxu0 %v1480
        %v1553 = vpop.f32.mrf.mxu0
        %v1554 = vadd.f32 0.0, %v1553
        %v1555 = vpop.f32.mrf.mxu0
        %1556 = vdwg.mxu0
        %v1557 = vadd.f32 %v1457, %v1549
        %v1558 = vadd.f32 %v1462, %v1554
        %v1559 = vld [vmem:[%s10] sm:$0x1]
        %v1561 = vlaneseq
        %v1562 = vshrl.u32 %v1561, 7
        %v1563 = vsub.s32 0, %v1562
        %v1564 = vrot.slane %v1559, %v1563
        %v1566 = vmul.f32 %v1557, %v1564
        %v1567 = vmul.f32 %v1558, %v1564
        %v1568 = vld [vmem:[%s11] sm:$0x1]
        %v1570 = vlaneseq
        %v1571 = vshrl.u32 %v1570, 7
        %v1572 = vsub.s32 0, %v1571
        %v1573 = vrot.slane %v1568, %v1572
        %v1575 = vadd.f32 %v1566, %v1573
        %v1576 = vadd.f32 %v1567, %v1573
        %v1577 = vmax.f32 %v1575, 0.0
        %v1578 = vmax.f32 %v1576, 0.0
        %1579 = vst.msk [vmem:[%s502] sm:$0xff] %vm607, %v1577
        %1580 = vst.msk [vmem:[%s502 + $0x8] sm:$0xff] %vm607, %v1578
        %s1581 = sand.u32 %s301, 1
        %s1582 = scalar_lea.sflag [#allocation7], %s1581
        %s1583 = sand.u32 %s301, 1
        %s1584 = smul.addr %s1583, 16
        %s1585 = scalar_lea.vmem [#allocation14], %s1584
        // Predicated region
        $region89: #{tpu_custom_call.1} parent=67 // pred_check
          %p1586 = pneg %p311
        $region90: #{tpu_custom_call.1} parent=67 // pred_check_branch
          %1588 = sbr.rel (%p1586) target = $region92
        $region91: #{tpu_custom_call.1} parent=67 // pred_region
          %s1590 = ssub.s32 256, 256
          %1591 = vsyncadd %s1582, %s1590
          %s1592 = smul.addr %s31, 2
          %s1593 = smul.addr %s1592, 128
          %s1594 = scalar_lea.hbm %s12, %s1593
          %s1595 = sshll.u32 %s1585, 4
          %s1596 = int_to_ptr.vmem [resolvable:$true] %s1595
          %1601 = dma.vmem_to_hbm [thread:$0]  %s1596, 256, %s1594, %s1582, 128, 128, 8
        $region92: #{tpu_custom_call.1} parent=67 // pred_fallthru
          _
      $region68: #{tpu_custom_call.1} parent=5 // pred_fallthru
        _
      %p1602 = scmp.le.s32.totalorder 2, %s26
      // Predicated region
      $region93: #{tpu_custom_call.1} parent=5 // pred_check
        %p1603 = pneg %p1602
      $region94: #{tpu_custom_call.1} parent=5 // pred_check_branch
        %1605 = sbr.rel (%p1603) target = $region96
      $region95: #{tpu_custom_call.1} parent=5 // pred_region
        %s1606 = ssub.s32 %s26, 2
        // Predicated region
        $region97: #{tpu_custom_call.1} parent=95 // pred_check
          %p1607 = pneg %p317
        $region98: #{tpu_custom_call.1} parent=95 // pred_check_branch
          %1609 = sbr.rel (%p1607) target = $region100
        $region99: #{tpu_custom_call.1} parent=95 // pred_region
          %s1610 = sand.u32 %s302, 1
          %s1611 = scalar_lea.sflag [#allocation7], %s1610
          %s1612 = sand.u32 %s302, 1
          %s1613 = smul.addr %s1612, 16
          %s1614 = scalar_lea.vmem [#allocation14], %s1613
          %1615 = dma.done %s1611, 256
        $region100: #{tpu_custom_call.1} parent=95 // pred_fallthru
          _
      $region96: #{tpu_custom_call.1} parent=5 // pred_fallthru
        _
    $region6: #{tpu_custom_call.1} parent=1 // loop_footer
      %s30 = sadd.s32 1, %s26
    $region7: #{tpu_custom_call.1} parent=1 // loop_footer_branch
      %25 = sbr.rel target = $region3
    $region8: #{tpu_custom_call.1} parent=1 // loop_exit
      _
    %1616 = vsyncpa [#allocation6], 1
    %s1617 = scalar_lea.sflag [#allocation6], 1
    %1618 = vsyncpa %s1617, 1
    %1619 = vsyncpa [#allocation9], 1
    %1620 = vsyncpa [#allocation12], 1
    %1621 = vsyncpa [#allocation7], 1
    %s1622 = scalar_lea.sflag [#allocation7], 1
    %1623 = vsyncpa %s1622, 1

</llo_original>
